<compile_context>
chip_gen: v7x
topology: tpu7x:2x2x1
jax: 0.10.0
libtpu: 0.0.40
codegen_flags: <defaults>
</compile_context>

<pallas_src>
import numpy as np
import jax
import jax.numpy as jnp
from jax.experimental import pallas as pl
from jax.experimental.pallas import tpu as pltpu


def refine_pallas(x_ncdhw, w1, b1, w2, b2):
    """x_ncdhw: [B, C, T, H, W] (PyTorch conv layout). Returns same layout."""
    B, C, T, H, W = x_ncdhw.shape
    N = T * H * W
    Cr = -(-C // 8) * 8            # channels rounded up to a sublane multiple
    K = 27 * Cr
    CENTER = 13                    # tap (dt, dh, dw) == (0, 0, 0): offset 0, all-ones mask

    # ---- flatten input: NCDHW -> [B, C, THW] (pure reshape, no transpose/pad) ----
    x_flat = x_ncdhw.reshape(B, C, N)

    # ---- static tap offsets (flat-index deltas) and boundary masks ---------------
    offs = []
    masks_np = np.empty((27, N), np.float32)
    tt, hh, ww = np.meshgrid(np.arange(T), np.arange(H), np.arange(W), indexing="ij")
    tap = 0
    for dt in (-1, 0, 1):
        for dh in (-1, 0, 1):
            for dw in (-1, 0, 1):
                offs.append(dt * H * W + dh * W + dw)
                ok = ((tt + dt >= 0) & (tt + dt < T) &
                      (hh + dh >= 0) & (hh + dh < H) &
                      (ww + dw >= 0) & (ww + dw < W))
                masks_np[tap] = ok.reshape(-1).astype(np.float32)
                tap += 1
    offs = tuple(offs)
    # pre-broadcast tap-major to Cr sublanes: row tap*Cr + ci == masks[tap]
    mfull = jnp.asarray(np.repeat(masks_np, Cr, axis=0))           # [27*Cr, N]

    # ---- repack conv weights -----------------------------------------------------
    # conv1: torch [C_out, C_in, 3,3,3] -> w1p[co, tap*Cr + ci], zero-padded to Cr
    w1t = jnp.transpose(w1, (2, 3, 4, 0, 1)).reshape(27, C, C)     # [27, Cout, Cin]
    w1t = jnp.pad(w1t, ((0, 0), (0, Cr - C), (0, Cr - C)))         # [27, Cr, Cr]
    w1p = jnp.transpose(w1t, (1, 0, 2)).reshape(Cr, K).astype(jnp.float32)
    b1p = jnp.pad(b1.astype(jnp.float32), (0, Cr - C)).reshape(Cr, 1)
    # conv2: torch [1, C_in, 3,3,3] -> w2p[tap, ci] (tap-major, padded to Cr columns)
    w2t = jnp.transpose(w2, (2, 3, 4, 0, 1)).reshape(27, C)        # [27, Cin]
    w2p = jnp.pad(w2t, ((0, 0), (0, Cr - C))).astype(jnp.float32)  # [27, Cr]
    b2p = b2.astype(jnp.float32).reshape(1, 1)

    def kernel(x_ref, m_ref, w1_ref, b1_ref, w2_ref, b2_ref, o_ref, buf, gbuf):
        # x_ref: (1, C, N)  m_ref: (27*Cr, N)  w1_ref: (Cr, 27*Cr)  b1_ref: (Cr, 1)
        # w2_ref: (27, Cr)  b2_ref: (1, 1) SMEM  o_ref: (1, C, N)
        # buf: (27*Cr, N) f32 scratch  gbuf: (27, N) f32 scratch
        x = x_ref[0].astype(jnp.float32)                           # [C, N]
        if Cr > C:
            xp = jnp.concatenate(
                [x, jnp.zeros((Cr - C, N), jnp.float32)], axis=0)  # [Cr, N]
        else:
            xp = x

        # ---- conv1 expand: stream 27 masked lane-rolled taps into VMEM scratch ----
        for t_idx, off in enumerate(offs):
            sh = (-off) % N
            r = pltpu.roll(xp, shift=sh, axis=1) if sh else xp
            if t_idx != CENTER:
                r = r * m_ref[pl.ds(t_idx * Cr, Cr), :]            # pre-broadcast mask slab
            buf[pl.ds(t_idx * Cr, Cr), :] = r

        # conv1 (C -> C) as a single matmul over K = 27*Cr, then LeakyReLU(0.2)
        h1 = jnp.dot(w1_ref[...], buf[...],
                     preferred_element_type=jnp.float32) + b1_ref[...]
        h1 = jnp.where(h1 >= 0.0, h1, 0.2 * h1)                    # [Cr, N]; pad rows stay 0

        # ---- conv2 (C -> 1) reordered: one [27,Cr]x[Cr,N] matmul, then per-tap
        #      masked rolls of single [1, N] rows (no second [27*Cr, N] expand) ----
        gbuf[...] = jnp.dot(w2_ref[...], h1, preferred_element_type=jnp.float32)
        s = gbuf[pl.ds(CENTER, 1), :]                              # center tap: no roll/mask
        for t_idx, off in enumerate(offs):
            if t_idx == CENTER:
                continue
            sh = (-off) % N
            row = gbuf[pl.ds(t_idx, 1), :]                         # [1, N]
            if sh:
                row = pltpu.roll(row, shift=sh, axis=1)
            s = s + row * m_ref[pl.ds(t_idx * Cr, 1), :]
        feat = jax.nn.sigmoid(s + b2_ref[0, 0])                    # [1, N]

        # gate: re-read x from the ref so its f32 copy is not live through the rolls
        o_ref[0] = (feat * x_ref[0].astype(jnp.float32)).astype(o_ref.dtype)

    grid_spec = pltpu.PrefetchScalarGridSpec(
        num_scalar_prefetch=0,
        grid=(B,),
        in_specs=[
            pl.BlockSpec((1, C, N), lambda b: (b, 0, 0)),          # x
            pl.BlockSpec((27 * Cr, N), lambda b: (0, 0)),          # pre-broadcast tap masks
            pl.BlockSpec((Cr, K), lambda b: (0, 0)),               # conv1 weight
            pl.BlockSpec((Cr, 1), lambda b: (0, 0)),               # conv1 bias
            pl.BlockSpec((27, Cr), lambda b: (0, 0)),              # conv2 tap weights
            pl.BlockSpec(memory_space=pltpu.MemorySpace.SMEM),     # conv2 bias (scalar)
        ],
        out_specs=pl.BlockSpec((1, C, N), lambda b: (b, 0, 0)),
        scratch_shapes=[
            pltpu.VMEM((27 * Cr, N), jnp.float32),                 # conv1 expand buffer
            pltpu.VMEM((27, N), jnp.float32),                      # conv2 per-tap rows
        ],
    )

    out_flat = pl.pallas_call(
        kernel,
        out_shape=jax.ShapeDtypeStruct((B, C, N), x_ncdhw.dtype),
        grid_spec=grid_spec,
        compiler_params=pltpu.CompilerParams(
            dimension_semantics=("parallel",)),
    )(x_flat, mfull, w1p, b1p, w2p, b2p)

    return out_flat.reshape(B, C, T, H, W)


def refine_reference(x, w1, b1, w2, b2):
    """Pure-JAX reference (same NCDHW / OIDHW layouts as PyTorch)."""
    dn = ("NCDHW", "OIDHW", "NCDHW")
    y = jax.lax.conv_general_dilated(x, w1, (1, 1, 1), [(1, 1)] * 3, dimension_numbers=dn)
    y = y + b1[None, :, None, None, None]
    y = jnp.where(y >= 0.0, y, 0.2 * y)
    y = jax.lax.conv_general_dilated(y, w2, (1, 1, 1), [(1, 1)] * 3, dimension_numbers=dn)
    y = y + b2[None, :, None, None, None]
    return jax.nn.sigmoid(y) * x


if __name__ == "__main__":
    # Small shapes consistent with Refine: dim=C channels, t_length-ish T, spatial HxW.
    B, C, T, H, W = 2, 4, 4, 8, 8

    key = jax.random.PRNGKey(0)
    kx, k1, kb1, k2, kb2 = jax.random.split(key, 5)

    x = jax.random.normal(kx, (B, C, T, H, W), dtype=jnp.float32)
    w1 = jax.random.normal(k1, (C, C, 3, 3, 3), dtype=jnp.float32) * 0.1
    b1 = jax.random.normal(kb1, (C,), dtype=jnp.float32) * 0.1
    w2 = jax.random.normal(k2, (1, C, 3, 3, 3), dtype=jnp.float32) * 0.1
    b2 = jax.random.normal(kb2, (1,), dtype=jnp.float32) * 0.1

    out = jax.block_until_ready(refine_pallas(x, w1, b1, w2, b2))
    ref = jax.block_until_ready(refine_reference(x, w1, b1, w2, b2))

    assert out.shape == (B, C, T, H, W)
    max_err = float(jnp.max(jnp.abs(out - ref)))
    assert jnp.allclose(out, ref, atol=2e-4, rtol=2e-4), max_err

    print("KERNEL_OK")
</pallas_src>

<mosaic_0001>
module attributes {stable_mosaic.version = 11 : i64} {
  func.func @kernel(%arg0: i32, %arg1: memref<1x4x256xf32, #tpu.memory_space<vmem>>, %arg2: memref<216x256xf32, #tpu.memory_space<vmem>>, %arg3: memref<8x216xf32, #tpu.memory_space<vmem>>, %arg4: memref<8x1xf32, #tpu.memory_space<vmem>>, %arg5: memref<27x8xf32, #tpu.memory_space<vmem>>, %arg6: memref<1x1xf32, #tpu.memory_space<smem>>, %arg7: memref<1x4x256xf32, #tpu.memory_space<vmem>>, %arg8: memref<216x256xf32, #tpu.memory_space<vmem>>, %arg9: memref<27x256xf32, #tpu.memory_space<vmem>>) attributes {dimension_semantics = [#tpu.dimension_semantics<parallel>], iteration_bounds = array<i64: 2>, scalar_prefetch = 0 : i64, scratch_operands = 2 : i64, tpu.core_type = #tpu.core_type<tc>, window_params = [{transform_indices = @transform_0, window_bounds = array<i64: 1, 4, 256>}, {pipeline_mode = #tpu.pipeline_mode<synchronous>, transform_indices = @transform_1, window_bounds = array<i64: 216, 256>}, {pipeline_mode = #tpu.pipeline_mode<synchronous>, transform_indices = @transform_2, window_bounds = array<i64: 8, 216>}, {pipeline_mode = #tpu.pipeline_mode<synchronous>, transform_indices = @transform_3, window_bounds = array<i64: 8, 1>}, {pipeline_mode = #tpu.pipeline_mode<synchronous>, transform_indices = @transform_4, window_bounds = array<i64: 27, 8>}, {transform_indices = @transform_5, window_bounds = array<i64: 1, 1>}, {transform_indices = @transform_6, window_bounds = array<i64: 1, 4, 256>}]} {
    %c0 = arith.constant 0 : index
    %c0_0 = arith.constant 0 : index
    %c0_1 = arith.constant 0 : index
    %0 = vector.load %arg1[%c0, %c0_0, %c0_1] : memref<1x4x256xf32, #tpu.memory_space<vmem>>, vector<1x4x256xf32>
    %1 = vector.shape_cast %0 : vector<1x4x256xf32> to vector<4x256xf32>
    %cst = arith.constant 0.000000e+00 : f32
    %2 = vector.broadcast %cst : f32 to vector<4x256xf32>
    %3 = tpu.concatenate %1, %2 in 0 : vector<4x256xf32>, vector<4x256xf32> -> vector<8x256xf32>
    %c73_i32 = arith.constant 73 : i32
    %4 = tpu.dynamic_rotate %3 by %c73_i32 dim 1 : vector<8x256xf32>, i32 -> vector<8x256xf32>
    %c0_2 = arith.constant 0 : index
    %c0_3 = arith.constant 0 : index
    %5 = vector.load %arg2[%c0_2, %c0_3] : memref<216x256xf32, #tpu.memory_space<vmem>>, vector<8x256xf32>
    %6 = arith.mulf %4, %5 : vector<8x256xf32>
    %c0_4 = arith.constant 0 : index
    %c0_5 = arith.constant 0 : index
    %7 = vector.load %arg8[%c0_4, %c0_5] : memref<216x256xf32, #tpu.memory_space<vmem>>, vector<8x256xf32>
    tpu.vector_store %arg8[%c0_4, %c0_5], %6 {strides = array<i32>} : memref<216x256xf32, #tpu.memory_space<vmem>>, vector<8x256xf32>,
    %c72_i32 = arith.constant 72 : i32
    %8 = tpu.dynamic_rotate %3 by %c72_i32 dim 1 : vector<8x256xf32>, i32 -> vector<8x256xf32>
    %c8 = arith.constant 8 : index
    %c0_6 = arith.constant 0 : index
    %9 = vector.load %arg2[%c8, %c0_6] : memref<216x256xf32, #tpu.memory_space<vmem>>, vector<8x256xf32>
    %10 = arith.mulf %8, %9 : vector<8x256xf32>
    %c8_7 = arith.constant 8 : index
    %c0_8 = arith.constant 0 : index
    %11 = vector.load %arg8[%c8_7, %c0_8] : memref<216x256xf32, #tpu.memory_space<vmem>>, vector<8x256xf32>
    tpu.vector_store %arg8[%c8_7, %c0_8], %10 {strides = array<i32>} : memref<216x256xf32, #tpu.memory_space<vmem>>, vector<8x256xf32>,
    %c71_i32 = arith.constant 71 : i32
    %12 = tpu.dynamic_rotate %3 by %c71_i32 dim 1 : vector<8x256xf32>, i32 -> vector<8x256xf32>
    %c16 = arith.constant 16 : index
    %c0_9 = arith.constant 0 : index
    %13 = vector.load %arg2[%c16, %c0_9] : memref<216x256xf32, #tpu.memory_space<vmem>>, vector<8x256xf32>
    %14 = arith.mulf %12, %13 : vector<8x256xf32>
    %c16_10 = arith.constant 16 : index
    %c0_11 = arith.constant 0 : index
    %15 = vector.load %arg8[%c16_10, %c0_11] : memref<216x256xf32, #tpu.memory_space<vmem>>, vector<8x256xf32>
    tpu.vector_store %arg8[%c16_10, %c0_11], %14 {strides = array<i32>} : memref<216x256xf32, #tpu.memory_space<vmem>>, vector<8x256xf32>,
    %c65_i32 = arith.constant 65 : i32
    %16 = tpu.dynamic_rotate %3 by %c65_i32 dim 1 : vector<8x256xf32>, i32 -> vector<8x256xf32>
    %c24 = arith.constant 24 : index
    %c0_12 = arith.constant 0 : index
    %17 = vector.load %arg2[%c24, %c0_12] : memref<216x256xf32, #tpu.memory_space<vmem>>, vector<8x256xf32>
    %18 = arith.mulf %16, %17 : vector<8x256xf32>
    %c24_13 = arith.constant 24 : index
    %c0_14 = arith.constant 0 : index
    %19 = vector.load %arg8[%c24_13, %c0_14] : memref<216x256xf32, #tpu.memory_space<vmem>>, vector<8x256xf32>
    tpu.vector_store %arg8[%c24_13, %c0_14], %18 {strides = array<i32>} : memref<216x256xf32, #tpu.memory_space<vmem>>, vector<8x256xf32>,
    %c64_i32 = arith.constant 64 : i32
    %20 = tpu.dynamic_rotate %3 by %c64_i32 dim 1 : vector<8x256xf32>, i32 -> vector<8x256xf32>
    %c32 = arith.constant 32 : index
    %c0_15 = arith.constant 0 : index
    %21 = vector.load %arg2[%c32, %c0_15] : memref<216x256xf32, #tpu.memory_space<vmem>>, vector<8x256xf32>
    %22 = arith.mulf %20, %21 : vector<8x256xf32>
    %c32_16 = arith.constant 32 : index
    %c0_17 = arith.constant 0 : index
    %23 = vector.load %arg8[%c32_16, %c0_17] : memref<216x256xf32, #tpu.memory_space<vmem>>, vector<8x256xf32>
    tpu.vector_store %arg8[%c32_16, %c0_17], %22 {strides = array<i32>} : memref<216x256xf32, #tpu.memory_space<vmem>>, vector<8x256xf32>,
    %c63_i32 = arith.constant 63 : i32
    %24 = tpu.dynamic_rotate %3 by %c63_i32 dim 1 : vector<8x256xf32>, i32 -> vector<8x256xf32>
    %c40 = arith.constant 40 : index
    %c0_18 = arith.constant 0 : index
    %25 = vector.load %arg2[%c40, %c0_18] : memref<216x256xf32, #tpu.memory_space<vmem>>, vector<8x256xf32>
    %26 = arith.mulf %24, %25 : vector<8x256xf32>
    %c40_19 = arith.constant 40 : index
    %c0_20 = arith.constant 0 : index
    %27 = vector.load %arg8[%c40_19, %c0_20] : memref<216x256xf32, #tpu.memory_space<vmem>>, vector<8x256xf32>
    tpu.vector_store %arg8[%c40_19, %c0_20], %26 {strides = array<i32>} : memref<216x256xf32, #tpu.memory_space<vmem>>, vector<8x256xf32>,
    %c57_i32 = arith.constant 57 : i32
    %28 = tpu.dynamic_rotate %3 by %c57_i32 dim 1 : vector<8x256xf32>, i32 -> vector<8x256xf32>
    %c48 = arith.constant 48 : index
    %c0_21 = arith.constant 0 : index
    %29 = vector.load %arg2[%c48, %c0_21] : memref<216x256xf32, #tpu.memory_space<vmem>>, vector<8x256xf32>
    %30 = arith.mulf %28, %29 : vector<8x256xf32>
    %c48_22 = arith.constant 48 : index
    %c0_23 = arith.constant 0 : index
    %31 = vector.load %arg8[%c48_22, %c0_23] : memref<216x256xf32, #tpu.memory_space<vmem>>, vector<8x256xf32>
    tpu.vector_store %arg8[%c48_22, %c0_23], %30 {strides = array<i32>} : memref<216x256xf32, #tpu.memory_space<vmem>>, vector<8x256xf32>,
    %c56_i32 = arith.constant 56 : i32
    %32 = tpu.dynamic_rotate %3 by %c56_i32 dim 1 : vector<8x256xf32>, i32 -> vector<8x256xf32>
    %c56 = arith.constant 56 : index
    %c0_24 = arith.constant 0 : index
    %33 = vector.load %arg2[%c56, %c0_24] : memref<216x256xf32, #tpu.memory_space<vmem>>, vector<8x256xf32>
    %34 = arith.mulf %32, %33 : vector<8x256xf32>
    %c56_25 = arith.constant 56 : index
    %c0_26 = arith.constant 0 : index
    %35 = vector.load %arg8[%c56_25, %c0_26] : memref<216x256xf32, #tpu.memory_space<vmem>>, vector<8x256xf32>
    tpu.vector_store %arg8[%c56_25, %c0_26], %34 {strides = array<i32>} : memref<216x256xf32, #tpu.memory_space<vmem>>, vector<8x256xf32>,
    %c55_i32 = arith.constant 55 : i32
    %36 = tpu.dynamic_rotate %3 by %c55_i32 dim 1 : vector<8x256xf32>, i32 -> vector<8x256xf32>
    %c64 = arith.constant 64 : index
    %c0_27 = arith.constant 0 : index
    %37 = vector.load %arg2[%c64, %c0_27] : memref<216x256xf32, #tpu.memory_space<vmem>>, vector<8x256xf32>
    %38 = arith.mulf %36, %37 : vector<8x256xf32>
    %c64_28 = arith.constant 64 : index
    %c0_29 = arith.constant 0 : index
    %39 = vector.load %arg8[%c64_28, %c0_29] : memref<216x256xf32, #tpu.memory_space<vmem>>, vector<8x256xf32>
    tpu.vector_store %arg8[%c64_28, %c0_29], %38 {strides = array<i32>} : memref<216x256xf32, #tpu.memory_space<vmem>>, vector<8x256xf32>,
    %c9_i32 = arith.constant 9 : i32
    %40 = tpu.dynamic_rotate %3 by %c9_i32 dim 1 : vector<8x256xf32>, i32 -> vector<8x256xf32>
    %c72 = arith.constant 72 : index
    %c0_30 = arith.constant 0 : index
    %41 = vector.load %arg2[%c72, %c0_30] : memref<216x256xf32, #tpu.memory_space<vmem>>, vector<8x256xf32>
    %42 = arith.mulf %40, %41 : vector<8x256xf32>
    %c72_31 = arith.constant 72 : index
    %c0_32 = arith.constant 0 : index
    %43 = vector.load %arg8[%c72_31, %c0_32] : memref<216x256xf32, #tpu.memory_space<vmem>>, vector<8x256xf32>
    tpu.vector_store %arg8[%c72_31, %c0_32], %42 {strides = array<i32>} : memref<216x256xf32, #tpu.memory_space<vmem>>, vector<8x256xf32>,
    %c8_i32 = arith.constant 8 : i32
    %44 = tpu.dynamic_rotate %3 by %c8_i32 dim 1 : vector<8x256xf32>, i32 -> vector<8x256xf32>
    %c80 = arith.constant 80 : index
    %c0_33 = arith.constant 0 : index
    %45 = vector.load %arg2[%c80, %c0_33] : memref<216x256xf32, #tpu.memory_space<vmem>>, vector<8x256xf32>
    %46 = arith.mulf %44, %45 : vector<8x256xf32>
    %c80_34 = arith.constant 80 : index
    %c0_35 = arith.constant 0 : index
    %47 = vector.load %arg8[%c80_34, %c0_35] : memref<216x256xf32, #tpu.memory_space<vmem>>, vector<8x256xf32>
    tpu.vector_store %arg8[%c80_34, %c0_35], %46 {strides = array<i32>} : memref<216x256xf32, #tpu.memory_space<vmem>>, vector<8x256xf32>,
    %c7_i32 = arith.constant 7 : i32
    %48 = tpu.dynamic_rotate %3 by %c7_i32 dim 1 : vector<8x256xf32>, i32 -> vector<8x256xf32>
    %c88 = arith.constant 88 : index
    %c0_36 = arith.constant 0 : index
    %49 = vector.load %arg2[%c88, %c0_36] : memref<216x256xf32, #tpu.memory_space<vmem>>, vector<8x256xf32>
    %50 = arith.mulf %48, %49 : vector<8x256xf32>
    %c88_37 = arith.constant 88 : index
    %c0_38 = arith.constant 0 : index
    %51 = vector.load %arg8[%c88_37, %c0_38] : memref<216x256xf32, #tpu.memory_space<vmem>>, vector<8x256xf32>
    tpu.vector_store %arg8[%c88_37, %c0_38], %50 {strides = array<i32>} : memref<216x256xf32, #tpu.memory_space<vmem>>, vector<8x256xf32>,
    %c1_i32 = arith.constant 1 : i32
    %52 = tpu.dynamic_rotate %3 by %c1_i32 dim 1 : vector<8x256xf32>, i32 -> vector<8x256xf32>
    %c96 = arith.constant 96 : index
    %c0_39 = arith.constant 0 : index
    %53 = vector.load %arg2[%c96, %c0_39] : memref<216x256xf32, #tpu.memory_space<vmem>>, vector<8x256xf32>
    %54 = arith.mulf %52, %53 : vector<8x256xf32>
    %c96_40 = arith.constant 96 : index
    %c0_41 = arith.constant 0 : index
    %55 = vector.load %arg8[%c96_40, %c0_41] : memref<216x256xf32, #tpu.memory_space<vmem>>, vector<8x256xf32>
    tpu.vector_store %arg8[%c96_40, %c0_41], %54 {strides = array<i32>} : memref<216x256xf32, #tpu.memory_space<vmem>>, vector<8x256xf32>,
    %c104 = arith.constant 104 : index
    %c0_42 = arith.constant 0 : index
    %56 = vector.load %arg8[%c104, %c0_42] : memref<216x256xf32, #tpu.memory_space<vmem>>, vector<8x256xf32>
    tpu.vector_store %arg8[%c104, %c0_42], %3 {strides = array<i32>} : memref<216x256xf32, #tpu.memory_space<vmem>>, vector<8x256xf32>,
    %c255_i32 = arith.constant 255 : i32
    %57 = tpu.dynamic_rotate %3 by %c255_i32 dim 1 : vector<8x256xf32>, i32 -> vector<8x256xf32>
    %c112 = arith.constant 112 : index
    %c0_43 = arith.constant 0 : index
    %58 = vector.load %arg2[%c112, %c0_43] : memref<216x256xf32, #tpu.memory_space<vmem>>, vector<8x256xf32>
    %59 = arith.mulf %57, %58 : vector<8x256xf32>
    %c112_44 = arith.constant 112 : index
    %c0_45 = arith.constant 0 : index
    %60 = vector.load %arg8[%c112_44, %c0_45] : memref<216x256xf32, #tpu.memory_space<vmem>>, vector<8x256xf32>
    tpu.vector_store %arg8[%c112_44, %c0_45], %59 {strides = array<i32>} : memref<216x256xf32, #tpu.memory_space<vmem>>, vector<8x256xf32>,
    %c249_i32 = arith.constant 249 : i32
    %61 = tpu.dynamic_rotate %3 by %c249_i32 dim 1 : vector<8x256xf32>, i32 -> vector<8x256xf32>
    %c120 = arith.constant 120 : index
    %c0_46 = arith.constant 0 : index
    %62 = vector.load %arg2[%c120, %c0_46] : memref<216x256xf32, #tpu.memory_space<vmem>>, vector<8x256xf32>
    %63 = arith.mulf %61, %62 : vector<8x256xf32>
    %c120_47 = arith.constant 120 : index
    %c0_48 = arith.constant 0 : index
    %64 = vector.load %arg8[%c120_47, %c0_48] : memref<216x256xf32, #tpu.memory_space<vmem>>, vector<8x256xf32>
    tpu.vector_store %arg8[%c120_47, %c0_48], %63 {strides = array<i32>} : memref<216x256xf32, #tpu.memory_space<vmem>>, vector<8x256xf32>,
    %c248_i32 = arith.constant 248 : i32
    %65 = tpu.dynamic_rotate %3 by %c248_i32 dim 1 : vector<8x256xf32>, i32 -> vector<8x256xf32>
    %c128 = arith.constant 128 : index
    %c0_49 = arith.constant 0 : index
    %66 = vector.load %arg2[%c128, %c0_49] : memref<216x256xf32, #tpu.memory_space<vmem>>, vector<8x256xf32>
    %67 = arith.mulf %65, %66 : vector<8x256xf32>
    %c128_50 = arith.constant 128 : index
    %c0_51 = arith.constant 0 : index
    %68 = vector.load %arg8[%c128_50, %c0_51] : memref<216x256xf32, #tpu.memory_space<vmem>>, vector<8x256xf32>
    tpu.vector_store %arg8[%c128_50, %c0_51], %67 {strides = array<i32>} : memref<216x256xf32, #tpu.memory_space<vmem>>, vector<8x256xf32>,
    %c247_i32 = arith.constant 247 : i32
    %69 = tpu.dynamic_rotate %3 by %c247_i32 dim 1 : vector<8x256xf32>, i32 -> vector<8x256xf32>
    %c136 = arith.constant 136 : index
    %c0_52 = arith.constant 0 : index
    %70 = vector.load %arg2[%c136, %c0_52] : memref<216x256xf32, #tpu.memory_space<vmem>>, vector<8x256xf32>
    %71 = arith.mulf %69, %70 : vector<8x256xf32>
    %c136_53 = arith.constant 136 : index
    %c0_54 = arith.constant 0 : index
    %72 = vector.load %arg8[%c136_53, %c0_54] : memref<216x256xf32, #tpu.memory_space<vmem>>, vector<8x256xf32>
    tpu.vector_store %arg8[%c136_53, %c0_54], %71 {strides = array<i32>} : memref<216x256xf32, #tpu.memory_space<vmem>>, vector<8x256xf32>,
    %c201_i32 = arith.constant 201 : i32
    %73 = tpu.dynamic_rotate %3 by %c201_i32 dim 1 : vector<8x256xf32>, i32 -> vector<8x256xf32>
    %c144 = arith.constant 144 : index
    %c0_55 = arith.constant 0 : index
    %74 = vector.load %arg2[%c144, %c0_55] : memref<216x256xf32, #tpu.memory_space<vmem>>, vector<8x256xf32>
    %75 = arith.mulf %73, %74 : vector<8x256xf32>
    %c144_56 = arith.constant 144 : index
    %c0_57 = arith.constant 0 : index
    %76 = vector.load %arg8[%c144_56, %c0_57] : memref<216x256xf32, #tpu.memory_space<vmem>>, vector<8x256xf32>
    tpu.vector_store %arg8[%c144_56, %c0_57], %75 {strides = array<i32>} : memref<216x256xf32, #tpu.memory_space<vmem>>, vector<8x256xf32>,
    %c200_i32 = arith.constant 200 : i32
    %77 = tpu.dynamic_rotate %3 by %c200_i32 dim 1 : vector<8x256xf32>, i32 -> vector<8x256xf32>
    %c152 = arith.constant 152 : index
    %c0_58 = arith.constant 0 : index
    %78 = vector.load %arg2[%c152, %c0_58] : memref<216x256xf32, #tpu.memory_space<vmem>>, vector<8x256xf32>
    %79 = arith.mulf %77, %78 : vector<8x256xf32>
    %c152_59 = arith.constant 152 : index
    %c0_60 = arith.constant 0 : index
    %80 = vector.load %arg8[%c152_59, %c0_60] : memref<216x256xf32, #tpu.memory_space<vmem>>, vector<8x256xf32>
    tpu.vector_store %arg8[%c152_59, %c0_60], %79 {strides = array<i32>} : memref<216x256xf32, #tpu.memory_space<vmem>>, vector<8x256xf32>,
    %c199_i32 = arith.constant 199 : i32
    %81 = tpu.dynamic_rotate %3 by %c199_i32 dim 1 : vector<8x256xf32>, i32 -> vector<8x256xf32>
    %c160 = arith.constant 160 : index
    %c0_61 = arith.constant 0 : index
    %82 = vector.load %arg2[%c160, %c0_61] : memref<216x256xf32, #tpu.memory_space<vmem>>, vector<8x256xf32>
    %83 = arith.mulf %81, %82 : vector<8x256xf32>
    %c160_62 = arith.constant 160 : index
    %c0_63 = arith.constant 0 : index
    %84 = vector.load %arg8[%c160_62, %c0_63] : memref<216x256xf32, #tpu.memory_space<vmem>>, vector<8x256xf32>
    tpu.vector_store %arg8[%c160_62, %c0_63], %83 {strides = array<i32>} : memref<216x256xf32, #tpu.memory_space<vmem>>, vector<8x256xf32>,
    %c193_i32 = arith.constant 193 : i32
    %85 = tpu.dynamic_rotate %3 by %c193_i32 dim 1 : vector<8x256xf32>, i32 -> vector<8x256xf32>
    %c168 = arith.constant 168 : index
    %c0_64 = arith.constant 0 : index
    %86 = vector.load %arg2[%c168, %c0_64] : memref<216x256xf32, #tpu.memory_space<vmem>>, vector<8x256xf32>
    %87 = arith.mulf %85, %86 : vector<8x256xf32>
    %c168_65 = arith.constant 168 : index
    %c0_66 = arith.constant 0 : index
    %88 = vector.load %arg8[%c168_65, %c0_66] : memref<216x256xf32, #tpu.memory_space<vmem>>, vector<8x256xf32>
    tpu.vector_store %arg8[%c168_65, %c0_66], %87 {strides = array<i32>} : memref<216x256xf32, #tpu.memory_space<vmem>>, vector<8x256xf32>,
    %c192_i32 = arith.constant 192 : i32
    %89 = tpu.dynamic_rotate %3 by %c192_i32 dim 1 : vector<8x256xf32>, i32 -> vector<8x256xf32>
    %c176 = arith.constant 176 : index
    %c0_67 = arith.constant 0 : index
    %90 = vector.load %arg2[%c176, %c0_67] : memref<216x256xf32, #tpu.memory_space<vmem>>, vector<8x256xf32>
    %91 = arith.mulf %89, %90 : vector<8x256xf32>
    %c176_68 = arith.constant 176 : index
    %c0_69 = arith.constant 0 : index
    %92 = vector.load %arg8[%c176_68, %c0_69] : memref<216x256xf32, #tpu.memory_space<vmem>>, vector<8x256xf32>
    tpu.vector_store %arg8[%c176_68, %c0_69], %91 {strides = array<i32>} : memref<216x256xf32, #tpu.memory_space<vmem>>, vector<8x256xf32>,
    %c191_i32 = arith.constant 191 : i32
    %93 = tpu.dynamic_rotate %3 by %c191_i32 dim 1 : vector<8x256xf32>, i32 -> vector<8x256xf32>
    %c184 = arith.constant 184 : index
    %c0_70 = arith.constant 0 : index
    %94 = vector.load %arg2[%c184, %c0_70] : memref<216x256xf32, #tpu.memory_space<vmem>>, vector<8x256xf32>
    %95 = arith.mulf %93, %94 : vector<8x256xf32>
    %c184_71 = arith.constant 184 : index
    %c0_72 = arith.constant 0 : index
    %96 = vector.load %arg8[%c184_71, %c0_72] : memref<216x256xf32, #tpu.memory_space<vmem>>, vector<8x256xf32>
    tpu.vector_store %arg8[%c184_71, %c0_72], %95 {strides = array<i32>} : memref<216x256xf32, #tpu.memory_space<vmem>>, vector<8x256xf32>,
    %c185_i32 = arith.constant 185 : i32
    %97 = tpu.dynamic_rotate %3 by %c185_i32 dim 1 : vector<8x256xf32>, i32 -> vector<8x256xf32>
    %c192 = arith.constant 192 : index
    %c0_73 = arith.constant 0 : index
    %98 = vector.load %arg2[%c192, %c0_73] : memref<216x256xf32, #tpu.memory_space<vmem>>, vector<8x256xf32>
    %99 = arith.mulf %97, %98 : vector<8x256xf32>
    %c192_74 = arith.constant 192 : index
    %c0_75 = arith.constant 0 : index
    %100 = vector.load %arg8[%c192_74, %c0_75] : memref<216x256xf32, #tpu.memory_space<vmem>>, vector<8x256xf32>
    tpu.vector_store %arg8[%c192_74, %c0_75], %99 {strides = array<i32>} : memref<216x256xf32, #tpu.memory_space<vmem>>, vector<8x256xf32>,
    %c184_i32 = arith.constant 184 : i32
    %101 = tpu.dynamic_rotate %3 by %c184_i32 dim 1 : vector<8x256xf32>, i32 -> vector<8x256xf32>
    %c200 = arith.constant 200 : index
    %c0_76 = arith.constant 0 : index
    %102 = vector.load %arg2[%c200, %c0_76] : memref<216x256xf32, #tpu.memory_space<vmem>>, vector<8x256xf32>
    %103 = arith.mulf %101, %102 : vector<8x256xf32>
    %c200_77 = arith.constant 200 : index
    %c0_78 = arith.constant 0 : index
    %104 = vector.load %arg8[%c200_77, %c0_78] : memref<216x256xf32, #tpu.memory_space<vmem>>, vector<8x256xf32>
    tpu.vector_store %arg8[%c200_77, %c0_78], %103 {strides = array<i32>} : memref<216x256xf32, #tpu.memory_space<vmem>>, vector<8x256xf32>,
    %c183_i32 = arith.constant 183 : i32
    %105 = tpu.dynamic_rotate %3 by %c183_i32 dim 1 : vector<8x256xf32>, i32 -> vector<8x256xf32>
    %c208 = arith.constant 208 : index
    %c0_79 = arith.constant 0 : index
    %106 = vector.load %arg2[%c208, %c0_79] : memref<216x256xf32, #tpu.memory_space<vmem>>, vector<8x256xf32>
    %107 = arith.mulf %105, %106 : vector<8x256xf32>
    %c208_80 = arith.constant 208 : index
    %c0_81 = arith.constant 0 : index
    %108 = vector.load %arg8[%c208_80, %c0_81] : memref<216x256xf32, #tpu.memory_space<vmem>>, vector<8x256xf32>
    tpu.vector_store %arg8[%c208_80, %c0_81], %107 {strides = array<i32>} : memref<216x256xf32, #tpu.memory_space<vmem>>, vector<8x256xf32>,
    %c0_82 = arith.constant 0 : index
    %c0_83 = arith.constant 0 : index
    %109 = vector.load %arg3[%c0_82, %c0_83] : memref<8x216xf32, #tpu.memory_space<vmem>>, vector<8x216xf32>
    %c0_84 = arith.constant 0 : index
    %c0_85 = arith.constant 0 : index
    %110 = vector.load %arg8[%c0_84, %c0_85] : memref<216x256xf32, #tpu.memory_space<vmem>>, vector<216x256xf32>
    %cst_86 = arith.constant dense<0.000000e+00> : vector<8x256xf32>
    %111 = tpu.matmul %109, %110, %cst_86 {dimension_numbers = #tpu.dot_dimension_numbers<[1], [0], [0], [1], [0, 0, 1, 1], [], []>} : vector<8x216xf32>, vector<216x256xf32>, vector<8x256xf32> -> vector<8x256xf32>
    %c0_87 = arith.constant 0 : index
    %c0_88 = arith.constant 0 : index
    %112 = vector.load %arg4[%c0_87, %c0_88] : memref<8x1xf32, #tpu.memory_space<vmem>>, vector<8x1xf32>
    %113 = vector.broadcast %112 : vector<8x1xf32> to vector<8x256xf32>
    %114 = arith.addf %111, %113 : vector<8x256xf32>
    %cst_89 = arith.constant 0.000000e+00 : f32
    %115 = vector.broadcast %cst_89 : f32 to vector<8x256xf32>
    %116 = arith.cmpf oge, %114, %115 : vector<8x256xf32>
    %cst_90 = arith.constant 2.000000e-01 : f32
    %117 = vector.broadcast %cst_90 : f32 to vector<8x256xf32>
    %118 = arith.mulf %117, %114 : vector<8x256xf32>
    %119 = arith.select %116, %114, %118 : vector<8x256xi1>, vector<8x256xf32>
    %c0_91 = arith.constant 0 : index
    %c0_92 = arith.constant 0 : index
    %120 = vector.load %arg5[%c0_91, %c0_92] : memref<27x8xf32, #tpu.memory_space<vmem>>, vector<27x8xf32>
    %cst_93 = arith.constant dense<0.000000e+00> : vector<27x256xf32>
    %121 = tpu.matmul %120, %119, %cst_93 {dimension_numbers = #tpu.dot_dimension_numbers<[1], [0], [0], [1], [0, 0, 1, 1], [], []>} : vector<27x8xf32>, vector<8x256xf32>, vector<27x256xf32> -> vector<27x256xf32>
    %c0_94 = arith.constant 0 : index
    %c0_95 = arith.constant 0 : index
    %122 = vector.load %arg9[%c0_94, %c0_95] : memref<27x256xf32, #tpu.memory_space<vmem>>, vector<27x256xf32>
    tpu.vector_store %arg9[%c0_94, %c0_95], %121 {strides = array<i32>} : memref<27x256xf32, #tpu.memory_space<vmem>>, vector<27x256xf32>,
    %c13 = arith.constant 13 : index
    %c0_96 = arith.constant 0 : index
    %123 = vector.load %arg9[%c13, %c0_96] : memref<27x256xf32, #tpu.memory_space<vmem>>, vector<1x256xf32>
    %c0_97 = arith.constant 0 : index
    %c0_98 = arith.constant 0 : index
    %124 = vector.load %arg9[%c0_97, %c0_98] : memref<27x256xf32, #tpu.memory_space<vmem>>, vector<1x256xf32>
    %c73_i32_99 = arith.constant 73 : i32
    %125 = tpu.dynamic_rotate %124 by %c73_i32_99 dim 1 : vector<1x256xf32>, i32 -> vector<1x256xf32>
    %c0_100 = arith.constant 0 : index
    %c0_101 = arith.constant 0 : index
    %126 = vector.load %arg2[%c0_100, %c0_101] : memref<216x256xf32, #tpu.memory_space<vmem>>, vector<1x256xf32>
    %127 = arith.mulf %125, %126 : vector<1x256xf32>
    %128 = arith.addf %123, %127 : vector<1x256xf32>
    %c1 = arith.constant 1 : index
    %c0_102 = arith.constant 0 : index
    %129 = vector.load %arg9[%c1, %c0_102] : memref<27x256xf32, #tpu.memory_space<vmem>>, vector<1x256xf32>
    %c72_i32_103 = arith.constant 72 : i32
    %130 = tpu.dynamic_rotate %129 by %c72_i32_103 dim 1 : vector<1x256xf32>, i32 -> vector<1x256xf32>
    %c8_104 = arith.constant 8 : index
    %c0_105 = arith.constant 0 : index
    %131 = vector.load %arg2[%c8_104, %c0_105] : memref<216x256xf32, #tpu.memory_space<vmem>>, vector<1x256xf32>
    %132 = arith.mulf %130, %131 : vector<1x256xf32>
    %133 = arith.addf %128, %132 : vector<1x256xf32>
    %c2 = arith.constant 2 : index
    %c0_106 = arith.constant 0 : index
    %134 = vector.load %arg9[%c2, %c0_106] : memref<27x256xf32, #tpu.memory_space<vmem>>, vector<1x256xf32>
    %c71_i32_107 = arith.constant 71 : i32
    %135 = tpu.dynamic_rotate %134 by %c71_i32_107 dim 1 : vector<1x256xf32>, i32 -> vector<1x256xf32>
    %c16_108 = arith.constant 16 : index
    %c0_109 = arith.constant 0 : index
    %136 = vector.load %arg2[%c16_108, %c0_109] : memref<216x256xf32, #tpu.memory_space<vmem>>, vector<1x256xf32>
    %137 = arith.mulf %135, %136 : vector<1x256xf32>
    %138 = arith.addf %133, %137 : vector<1x256xf32>
    %c3 = arith.constant 3 : index
    %c0_110 = arith.constant 0 : index
    %139 = vector.load %arg9[%c3, %c0_110] : memref<27x256xf32, #tpu.memory_space<vmem>>, vector<1x256xf32>
    %c65_i32_111 = arith.constant 65 : i32
    %140 = tpu.dynamic_rotate %139 by %c65_i32_111 dim 1 : vector<1x256xf32>, i32 -> vector<1x256xf32>
    %c24_112 = arith.constant 24 : index
    %c0_113 = arith.constant 0 : index
    %141 = vector.load %arg2[%c24_112, %c0_113] : memref<216x256xf32, #tpu.memory_space<vmem>>, vector<1x256xf32>
    %142 = arith.mulf %140, %141 : vector<1x256xf32>
    %143 = arith.addf %138, %142 : vector<1x256xf32>
    %c4 = arith.constant 4 : index
    %c0_114 = arith.constant 0 : index
    %144 = vector.load %arg9[%c4, %c0_114] : memref<27x256xf32, #tpu.memory_space<vmem>>, vector<1x256xf32>
    %c64_i32_115 = arith.constant 64 : i32
    %145 = tpu.dynamic_rotate %144 by %c64_i32_115 dim 1 : vector<1x256xf32>, i32 -> vector<1x256xf32>
    %c32_116 = arith.constant 32 : index
    %c0_117 = arith.constant 0 : index
    %146 = vector.load %arg2[%c32_116, %c0_117] : memref<216x256xf32, #tpu.memory_space<vmem>>, vector<1x256xf32>
    %147 = arith.mulf %145, %146 : vector<1x256xf32>
    %148 = arith.addf %143, %147 : vector<1x256xf32>
    %c5 = arith.constant 5 : index
    %c0_118 = arith.constant 0 : index
    %149 = vector.load %arg9[%c5, %c0_118] : memref<27x256xf32, #tpu.memory_space<vmem>>, vector<1x256xf32>
    %c63_i32_119 = arith.constant 63 : i32
    %150 = tpu.dynamic_rotate %149 by %c63_i32_119 dim 1 : vector<1x256xf32>, i32 -> vector<1x256xf32>
    %c40_120 = arith.constant 40 : index
    %c0_121 = arith.constant 0 : index
    %151 = vector.load %arg2[%c40_120, %c0_121] : memref<216x256xf32, #tpu.memory_space<vmem>>, vector<1x256xf32>
    %152 = arith.mulf %150, %151 : vector<1x256xf32>
    %153 = arith.addf %148, %152 : vector<1x256xf32>
    %c6 = arith.constant 6 : index
    %c0_122 = arith.constant 0 : index
    %154 = vector.load %arg9[%c6, %c0_122] : memref<27x256xf32, #tpu.memory_space<vmem>>, vector<1x256xf32>
    %c57_i32_123 = arith.constant 57 : i32
    %155 = tpu.dynamic_rotate %154 by %c57_i32_123 dim 1 : vector<1x256xf32>, i32 -> vector<1x256xf32>
    %c48_124 = arith.constant 48 : index
    %c0_125 = arith.constant 0 : index
    %156 = vector.load %arg2[%c48_124, %c0_125] : memref<216x256xf32, #tpu.memory_space<vmem>>, vector<1x256xf32>
    %157 = arith.mulf %155, %156 : vector<1x256xf32>
    %158 = arith.addf %153, %157 : vector<1x256xf32>
    %c7 = arith.constant 7 : index
    %c0_126 = arith.constant 0 : index
    %159 = vector.load %arg9[%c7, %c0_126] : memref<27x256xf32, #tpu.memory_space<vmem>>, vector<1x256xf32>
    %c56_i32_127 = arith.constant 56 : i32
    %160 = tpu.dynamic_rotate %159 by %c56_i32_127 dim 1 : vector<1x256xf32>, i32 -> vector<1x256xf32>
    %c56_128 = arith.constant 56 : index
    %c0_129 = arith.constant 0 : index
    %161 = vector.load %arg2[%c56_128, %c0_129] : memref<216x256xf32, #tpu.memory_space<vmem>>, vector<1x256xf32>
    %162 = arith.mulf %160, %161 : vector<1x256xf32>
    %163 = arith.addf %158, %162 : vector<1x256xf32>
    %c8_130 = arith.constant 8 : index
    %c0_131 = arith.constant 0 : index
    %164 = vector.load %arg9[%c8_130, %c0_131] : memref<27x256xf32, #tpu.memory_space<vmem>>, vector<1x256xf32>
    %c55_i32_132 = arith.constant 55 : i32
    %165 = tpu.dynamic_rotate %164 by %c55_i32_132 dim 1 : vector<1x256xf32>, i32 -> vector<1x256xf32>
    %c64_133 = arith.constant 64 : index
    %c0_134 = arith.constant 0 : index
    %166 = vector.load %arg2[%c64_133, %c0_134] : memref<216x256xf32, #tpu.memory_space<vmem>>, vector<1x256xf32>
    %167 = arith.mulf %165, %166 : vector<1x256xf32>
    %168 = arith.addf %163, %167 : vector<1x256xf32>
    %c9 = arith.constant 9 : index
    %c0_135 = arith.constant 0 : index
    %169 = vector.load %arg9[%c9, %c0_135] : memref<27x256xf32, #tpu.memory_space<vmem>>, vector<1x256xf32>
    %c9_i32_136 = arith.constant 9 : i32
    %170 = tpu.dynamic_rotate %169 by %c9_i32_136 dim 1 : vector<1x256xf32>, i32 -> vector<1x256xf32>
    %c72_137 = arith.constant 72 : index
    %c0_138 = arith.constant 0 : index
    %171 = vector.load %arg2[%c72_137, %c0_138] : memref<216x256xf32, #tpu.memory_space<vmem>>, vector<1x256xf32>
    %172 = arith.mulf %170, %171 : vector<1x256xf32>
    %173 = arith.addf %168, %172 : vector<1x256xf32>
    %c10 = arith.constant 10 : index
    %c0_139 = arith.constant 0 : index
    %174 = vector.load %arg9[%c10, %c0_139] : memref<27x256xf32, #tpu.memory_space<vmem>>, vector<1x256xf32>
    %c8_i32_140 = arith.constant 8 : i32
    %175 = tpu.dynamic_rotate %174 by %c8_i32_140 dim 1 : vector<1x256xf32>, i32 -> vector<1x256xf32>
    %c80_141 = arith.constant 80 : index
    %c0_142 = arith.constant 0 : index
    %176 = vector.load %arg2[%c80_141, %c0_142] : memref<216x256xf32, #tpu.memory_space<vmem>>, vector<1x256xf32>
    %177 = arith.mulf %175, %176 : vector<1x256xf32>
    %178 = arith.addf %173, %177 : vector<1x256xf32>
    %c11 = arith.constant 11 : index
    %c0_143 = arith.constant 0 : index
    %179 = vector.load %arg9[%c11, %c0_143] : memref<27x256xf32, #tpu.memory_space<vmem>>, vector<1x256xf32>
    %c7_i32_144 = arith.constant 7 : i32
    %180 = tpu.dynamic_rotate %179 by %c7_i32_144 dim 1 : vector<1x256xf32>, i32 -> vector<1x256xf32>
    %c88_145 = arith.constant 88 : index
    %c0_146 = arith.constant 0 : index
    %181 = vector.load %arg2[%c88_145, %c0_146] : memref<216x256xf32, #tpu.memory_space<vmem>>, vector<1x256xf32>
    %182 = arith.mulf %180, %181 : vector<1x256xf32>
    %183 = arith.addf %178, %182 : vector<1x256xf32>
    %c12 = arith.constant 12 : index
    %c0_147 = arith.constant 0 : index
    %184 = vector.load %arg9[%c12, %c0_147] : memref<27x256xf32, #tpu.memory_space<vmem>>, vector<1x256xf32>
    %c1_i32_148 = arith.constant 1 : i32
    %185 = tpu.dynamic_rotate %184 by %c1_i32_148 dim 1 : vector<1x256xf32>, i32 -> vector<1x256xf32>
    %c96_149 = arith.constant 96 : index
    %c0_150 = arith.constant 0 : index
    %186 = vector.load %arg2[%c96_149, %c0_150] : memref<216x256xf32, #tpu.memory_space<vmem>>, vector<1x256xf32>
    %187 = arith.mulf %185, %186 : vector<1x256xf32>
    %188 = arith.addf %183, %187 : vector<1x256xf32>
    %c14 = arith.constant 14 : index
    %c0_151 = arith.constant 0 : index
    %189 = vector.load %arg9[%c14, %c0_151] : memref<27x256xf32, #tpu.memory_space<vmem>>, vector<1x256xf32>
    %c255_i32_152 = arith.constant 255 : i32
    %190 = tpu.dynamic_rotate %189 by %c255_i32_152 dim 1 : vector<1x256xf32>, i32 -> vector<1x256xf32>
    %c112_153 = arith.constant 112 : index
    %c0_154 = arith.constant 0 : index
    %191 = vector.load %arg2[%c112_153, %c0_154] : memref<216x256xf32, #tpu.memory_space<vmem>>, vector<1x256xf32>
    %192 = arith.mulf %190, %191 : vector<1x256xf32>
    %193 = arith.addf %188, %192 : vector<1x256xf32>
    %c15 = arith.constant 15 : index
    %c0_155 = arith.constant 0 : index
    %194 = vector.load %arg9[%c15, %c0_155] : memref<27x256xf32, #tpu.memory_space<vmem>>, vector<1x256xf32>
    %c249_i32_156 = arith.constant 249 : i32
    %195 = tpu.dynamic_rotate %194 by %c249_i32_156 dim 1 : vector<1x256xf32>, i32 -> vector<1x256xf32>
    %c120_157 = arith.constant 120 : index
    %c0_158 = arith.constant 0 : index
    %196 = vector.load %arg2[%c120_157, %c0_158] : memref<216x256xf32, #tpu.memory_space<vmem>>, vector<1x256xf32>
    %197 = arith.mulf %195, %196 : vector<1x256xf32>
    %198 = arith.addf %193, %197 : vector<1x256xf32>
    %c16_159 = arith.constant 16 : index
    %c0_160 = arith.constant 0 : index
    %199 = vector.load %arg9[%c16_159, %c0_160] : memref<27x256xf32, #tpu.memory_space<vmem>>, vector<1x256xf32>
    %c248_i32_161 = arith.constant 248 : i32
    %200 = tpu.dynamic_rotate %199 by %c248_i32_161 dim 1 : vector<1x256xf32>, i32 -> vector<1x256xf32>
    %c128_162 = arith.constant 128 : index
    %c0_163 = arith.constant 0 : index
    %201 = vector.load %arg2[%c128_162, %c0_163] : memref<216x256xf32, #tpu.memory_space<vmem>>, vector<1x256xf32>
    %202 = arith.mulf %200, %201 : vector<1x256xf32>
    %203 = arith.addf %198, %202 : vector<1x256xf32>
    %c17 = arith.constant 17 : index
    %c0_164 = arith.constant 0 : index
    %204 = vector.load %arg9[%c17, %c0_164] : memref<27x256xf32, #tpu.memory_space<vmem>>, vector<1x256xf32>
    %c247_i32_165 = arith.constant 247 : i32
    %205 = tpu.dynamic_rotate %204 by %c247_i32_165 dim 1 : vector<1x256xf32>, i32 -> vector<1x256xf32>
    %c136_166 = arith.constant 136 : index
    %c0_167 = arith.constant 0 : index
    %206 = vector.load %arg2[%c136_166, %c0_167] : memref<216x256xf32, #tpu.memory_space<vmem>>, vector<1x256xf32>
    %207 = arith.mulf %205, %206 : vector<1x256xf32>
    %208 = arith.addf %203, %207 : vector<1x256xf32>
    %c18 = arith.constant 18 : index
    %c0_168 = arith.constant 0 : index
    %209 = vector.load %arg9[%c18, %c0_168] : memref<27x256xf32, #tpu.memory_space<vmem>>, vector<1x256xf32>
    %c201_i32_169 = arith.constant 201 : i32
    %210 = tpu.dynamic_rotate %209 by %c201_i32_169 dim 1 : vector<1x256xf32>, i32 -> vector<1x256xf32>
    %c144_170 = arith.constant 144 : index
    %c0_171 = arith.constant 0 : index
    %211 = vector.load %arg2[%c144_170, %c0_171] : memref<216x256xf32, #tpu.memory_space<vmem>>, vector<1x256xf32>
    %212 = arith.mulf %210, %211 : vector<1x256xf32>
    %213 = arith.addf %208, %212 : vector<1x256xf32>
    %c19 = arith.constant 19 : index
    %c0_172 = arith.constant 0 : index
    %214 = vector.load %arg9[%c19, %c0_172] : memref<27x256xf32, #tpu.memory_space<vmem>>, vector<1x256xf32>
    %c200_i32_173 = arith.constant 200 : i32
    %215 = tpu.dynamic_rotate %214 by %c200_i32_173 dim 1 : vector<1x256xf32>, i32 -> vector<1x256xf32>
    %c152_174 = arith.constant 152 : index
    %c0_175 = arith.constant 0 : index
    %216 = vector.load %arg2[%c152_174, %c0_175] : memref<216x256xf32, #tpu.memory_space<vmem>>, vector<1x256xf32>
    %217 = arith.mulf %215, %216 : vector<1x256xf32>
    %218 = arith.addf %213, %217 : vector<1x256xf32>
    %c20 = arith.constant 20 : index
    %c0_176 = arith.constant 0 : index
    %219 = vector.load %arg9[%c20, %c0_176] : memref<27x256xf32, #tpu.memory_space<vmem>>, vector<1x256xf32>
    %c199_i32_177 = arith.constant 199 : i32
    %220 = tpu.dynamic_rotate %219 by %c199_i32_177 dim 1 : vector<1x256xf32>, i32 -> vector<1x256xf32>
    %c160_178 = arith.constant 160 : index
    %c0_179 = arith.constant 0 : index
    %221 = vector.load %arg2[%c160_178, %c0_179] : memref<216x256xf32, #tpu.memory_space<vmem>>, vector<1x256xf32>
    %222 = arith.mulf %220, %221 : vector<1x256xf32>
    %223 = arith.addf %218, %222 : vector<1x256xf32>
    %c21 = arith.constant 21 : index
    %c0_180 = arith.constant 0 : index
    %224 = vector.load %arg9[%c21, %c0_180] : memref<27x256xf32, #tpu.memory_space<vmem>>, vector<1x256xf32>
    %c193_i32_181 = arith.constant 193 : i32
    %225 = tpu.dynamic_rotate %224 by %c193_i32_181 dim 1 : vector<1x256xf32>, i32 -> vector<1x256xf32>
    %c168_182 = arith.constant 168 : index
    %c0_183 = arith.constant 0 : index
    %226 = vector.load %arg2[%c168_182, %c0_183] : memref<216x256xf32, #tpu.memory_space<vmem>>, vector<1x256xf32>
    %227 = arith.mulf %225, %226 : vector<1x256xf32>
    %228 = arith.addf %223, %227 : vector<1x256xf32>
    %c22 = arith.constant 22 : index
    %c0_184 = arith.constant 0 : index
    %229 = vector.load %arg9[%c22, %c0_184] : memref<27x256xf32, #tpu.memory_space<vmem>>, vector<1x256xf32>
    %c192_i32_185 = arith.constant 192 : i32
    %230 = tpu.dynamic_rotate %229 by %c192_i32_185 dim 1 : vector<1x256xf32>, i32 -> vector<1x256xf32>
    %c176_186 = arith.constant 176 : index
    %c0_187 = arith.constant 0 : index
    %231 = vector.load %arg2[%c176_186, %c0_187] : memref<216x256xf32, #tpu.memory_space<vmem>>, vector<1x256xf32>
    %232 = arith.mulf %230, %231 : vector<1x256xf32>
    %233 = arith.addf %228, %232 : vector<1x256xf32>
    %c23 = arith.constant 23 : index
    %c0_188 = arith.constant 0 : index
    %234 = vector.load %arg9[%c23, %c0_188] : memref<27x256xf32, #tpu.memory_space<vmem>>, vector<1x256xf32>
    %c191_i32_189 = arith.constant 191 : i32
    %235 = tpu.dynamic_rotate %234 by %c191_i32_189 dim 1 : vector<1x256xf32>, i32 -> vector<1x256xf32>
    %c184_190 = arith.constant 184 : index
    %c0_191 = arith.constant 0 : index
    %236 = vector.load %arg2[%c184_190, %c0_191] : memref<216x256xf32, #tpu.memory_space<vmem>>, vector<1x256xf32>
    %237 = arith.mulf %235, %236 : vector<1x256xf32>
    %238 = arith.addf %233, %237 : vector<1x256xf32>
    %c24_192 = arith.constant 24 : index
    %c0_193 = arith.constant 0 : index
    %239 = vector.load %arg9[%c24_192, %c0_193] : memref<27x256xf32, #tpu.memory_space<vmem>>, vector<1x256xf32>
    %c185_i32_194 = arith.constant 185 : i32
    %240 = tpu.dynamic_rotate %239 by %c185_i32_194 dim 1 : vector<1x256xf32>, i32 -> vector<1x256xf32>
    %c192_195 = arith.constant 192 : index
    %c0_196 = arith.constant 0 : index
    %241 = vector.load %arg2[%c192_195, %c0_196] : memref<216x256xf32, #tpu.memory_space<vmem>>, vector<1x256xf32>
    %242 = arith.mulf %240, %241 : vector<1x256xf32>
    %243 = arith.addf %238, %242 : vector<1x256xf32>
    %c25 = arith.constant 25 : index
    %c0_197 = arith.constant 0 : index
    %244 = vector.load %arg9[%c25, %c0_197] : memref<27x256xf32, #tpu.memory_space<vmem>>, vector<1x256xf32>
    %c184_i32_198 = arith.constant 184 : i32
    %245 = tpu.dynamic_rotate %244 by %c184_i32_198 dim 1 : vector<1x256xf32>, i32 -> vector<1x256xf32>
    %c200_199 = arith.constant 200 : index
    %c0_200 = arith.constant 0 : index
    %246 = vector.load %arg2[%c200_199, %c0_200] : memref<216x256xf32, #tpu.memory_space<vmem>>, vector<1x256xf32>
    %247 = arith.mulf %245, %246 : vector<1x256xf32>
    %248 = arith.addf %243, %247 : vector<1x256xf32>
    %c26 = arith.constant 26 : index
    %c0_201 = arith.constant 0 : index
    %249 = vector.load %arg9[%c26, %c0_201] : memref<27x256xf32, #tpu.memory_space<vmem>>, vector<1x256xf32>
    %c183_i32_202 = arith.constant 183 : i32
    %250 = tpu.dynamic_rotate %249 by %c183_i32_202 dim 1 : vector<1x256xf32>, i32 -> vector<1x256xf32>
    %c208_203 = arith.constant 208 : index
    %c0_204 = arith.constant 0 : index
    %251 = vector.load %arg2[%c208_203, %c0_204] : memref<216x256xf32, #tpu.memory_space<vmem>>, vector<1x256xf32>
    %252 = arith.mulf %250, %251 : vector<1x256xf32>
    %253 = arith.addf %248, %252 : vector<1x256xf32>
    %c0_205 = arith.constant 0 : index
    %c0_206 = arith.constant 0 : index
    %254 = memref.load %arg6[%c0_205, %c0_206] : memref<1x1xf32, #tpu.memory_space<smem>>
    %255 = vector.broadcast %254 : f32 to vector<1x256xf32>
    %256 = arith.addf %253, %255 : vector<1x256xf32>
    %257 = arith.negf %256 : vector<1x256xf32>
    %258 = math.exp %257 : vector<1x256xf32>
    %cst_207 = arith.constant 1.000000e+00 : f32
    %259 = vector.broadcast %cst_207 : f32 to vector<1x256xf32>
    %260 = arith.addf %259, %258 : vector<1x256xf32>
    %261 = arith.divf %259, %260 : vector<1x256xf32>
    %c0_208 = arith.constant 0 : index
    %c0_209 = arith.constant 0 : index
    %c0_210 = arith.constant 0 : index
    %262 = vector.load %arg1[%c0_208, %c0_209, %c0_210] : memref<1x4x256xf32, #tpu.memory_space<vmem>>, vector<1x4x256xf32>
    %263 = vector.shape_cast %262 : vector<1x4x256xf32> to vector<4x256xf32>
    %264 = vector.broadcast %261 : vector<1x256xf32> to vector<4x256xf32>
    %265 = arith.mulf %264, %263 : vector<4x256xf32>
    %c0_211 = arith.constant 0 : index
    %c0_212 = arith.constant 0 : index
    %c0_213 = arith.constant 0 : index
    %266 = vector.load %arg7[%c0_211, %c0_212, %c0_213] : memref<1x4x256xf32, #tpu.memory_space<vmem>>, vector<1x4x256xf32>
    %267 = vector.shape_cast %266 : vector<1x4x256xf32> to vector<4x256xf32>
    %268 = vector.shape_cast %265 : vector<4x256xf32> to vector<1x4x256xf32>
    tpu.vector_store %arg7[%c0_211, %c0_212, %c0_213], %268 {strides = array<i32>} : memref<1x4x256xf32, #tpu.memory_space<vmem>>, vector<1x4x256xf32>,
    return
  }
  func.func @transform_0(%arg0: i32) -> (i32, i32, i32) {
    %c0_i32 = arith.constant 0 : i32
    %c0_i32_0 = arith.constant 0 : i32
    %c0_i32_1 = arith.constant 0 : i32
    return %arg0, %c0_i32, %c0_i32_0 : i32, i32, i32
  }
  func.func @transform_1(%arg0: i32) -> (i32, i32) {
    %c0_i32 = arith.constant 0 : i32
    %c0_i32_0 = arith.constant 0 : i32
    %c0_i32_1 = arith.constant 0 : i32
    return %c0_i32, %c0_i32_0 : i32, i32
  }
  func.func @transform_2(%arg0: i32) -> (i32, i32) {
    %c0_i32 = arith.constant 0 : i32
    %c0_i32_0 = arith.constant 0 : i32
    %c0_i32_1 = arith.constant 0 : i32
    return %c0_i32, %c0_i32_0 : i32, i32
  }
  func.func @transform_3(%arg0: i32) -> (i32, i32) {
    %c0_i32 = arith.constant 0 : i32
    %c0_i32_0 = arith.constant 0 : i32
    %c0_i32_1 = arith.constant 0 : i32
    return %c0_i32, %c0_i32_0 : i32, i32
  }
  func.func @transform_4(%arg0: i32) -> (i32, i32) {
    %c0_i32 = arith.constant 0 : i32
    %c0_i32_0 = arith.constant 0 : i32
    %c0_i32_1 = arith.constant 0 : i32
    return %c0_i32, %c0_i32_0 : i32, i32
  }
  func.func @transform_5(%arg0: i32) -> (i32, i32) {
    %c0_i32 = arith.constant 0 : i32
    %c0_i32_0 = arith.constant 0 : i32
    %c0_i32_1 = arith.constant 0 : i32
    return %c0_i32, %c0_i32_0 : i32, i32
  }
  func.func @transform_6(%arg0: i32) -> (i32, i32, i32) {
    %c0_i32 = arith.constant 0 : i32
    %c0_i32_0 = arith.constant 0 : i32
    %c0_i32_1 = arith.constant 0 : i32
    return %arg0, %c0_i32, %c0_i32_0 : i32, i32, i32
  }
}

</mosaic_0001>

<llo_original>
// kernel: tpu_custom_call.1
$region0: #{tpu_custom_call.1}
  #allocation0 [shape = 'u32[]', space=smem, size = 0x4, offset = 0x4, fixed_abs, tag = 'smem constant byte address 0x4 - core index']
  #allocation1 [shape = 'u32[144,128]{1,0:T(1,128)}', space=vmem, size = 0x12000, scoped, tag = 'internal scratch']
  #allocation2 [shape = 'f32[216,256]{1,0:T(8,128)}', space=vmem, size = 0x36000, scoped, tag = 'scratch operand']
  #allocation3 [shape = 'f32[27,256]{1,0:T(8,128)}', space=vmem, size = 0x8000, scoped, tag = 'scratch operand']
  #allocation4 [shape = 'f32[1,1]{1,0:T(1,128)S(6)}', space=smem, size = 0x200, scoped, tag = 'scoped memory for tpu_custom_call.1']
  %s0 = inlined_call_operand.vmem [shape: f32[2,4,256], index: 0, kind: input, shape index: {}]
  %s1 = inlined_call_operand.hbm [shape: f32[216,256], index: 1, kind: input, shape index: {}]
  %s2 = inlined_call_operand.vmem [shape: f32[8,216], index: 2, kind: input, shape index: {}]
  %s3 = inlined_call_operand.vmem [shape: f32[8,1], index: 3, kind: input, shape index: {}]
  %s4 = inlined_call_operand.vmem [shape: f32[27,8], index: 4, kind: input, shape index: {}]
  %s5 = inlined_call_operand.<no memory space> [shape: f32[1,1], index: 5, kind: input, shape index: {}]
  %s6 = inlined_call_operand.hbm [shape: f32[2,4,256], index: 6, kind: output, shape index: {}]
  %s7 = sld [smem:[#allocation0]]
  $region61: #{tpu_custom_call.1} parent=0
    _
  %s9 = ssub.s32 1, %s7
  %s10 = scalar_select 0, %s9, %s7
  %11 = sst [smem:[#allocation4]] %s5
  $region1: #{tpu_custom_call.1} parent=0
    #allocation5 [shape = 'u8[221184]{0}', space=vmem, size = 0x36000, scoped, tag = 'input window, operand 1, single buffered']
    #allocation6 [shape = 's32[2]{0}', space=sflag, size = 0x8, scoped, tag = 'scoped memory for tpu_custom_call.1']
    #allocation7 [shape = 's32[2]{0}', space=sflag, size = 0x8, scoped, tag = 'scoped memory for tpu_custom_call.1']
    #allocation8 [shape = 'u8[8192]{0}', space=vmem, size = 0x2000, scoped, tag = 'output window, operand 0']
    %12 = vsyncpa [#allocation6], 0
    %13 = vsyncpa [#allocation7], 0
    %s14 = scalar_lea.sflag [#allocation7], 1
    %15 = vsyncpa %s14, 0
    loop: start=0, step=1, limit=4
    $region2: #{tpu_custom_call.1} parent=1 // loop_pre_header
      _
    $region3: #{tpu_custom_call.1} parent=1 // loop_header
      %s17 = sphi 0, %s21
      %p18 = scmp.ge.s32.totalorder %s17, 4
      %s27 = sphi 0, %s29
      %s30 = sphi 0, %s27
      %s31 = sphi 0, %s30
      %s47 = sphi 0, %s31
      %s51 = sphi 0, %s51
      %s53 = sphi 0, %s51
      %s54 = sphi 0, %s53
      %s68 = sphi 0, %s54
      %s72 = sphi 0, %s72
      %s74 = sphi 0, %s72
      %s75 = sphi 0, %s74
      %s89 = sphi 0, %s75
      %s93 = sphi 0, %s93
      %s95 = sphi 0, %s93
      %s96 = sphi 0, %s95
      %s110 = sphi 0, %s96
      %s114 = sphi 0, %s114
      %s116 = sphi 0, %s114
      %s117 = sphi 0, %s116
      %s131 = sphi 0, %s117
      %s135 = sphi 0, %s135
      %s137 = sphi 0, %s135
      %s138 = sphi 0, %s137
      %s152 = sphi 0, %s138
      %s158 = sphi 0, %s160
      %s161 = sphi 0, %s158
      %s162 = sphi 0, %s161
      %s178 = sphi 0, %s162
    $region4: #{tpu_custom_call.1} parent=1 // loop_header_branch
      %20 = sbr.rel (%p18) target = $region8
    $region5: #{tpu_custom_call.1} parent=1 // loop_body
      %s22 = ssub.s32 %s17, 1
      %s23 = ssub.s32 %s17, 2
      %s24 = sadd.s32 %s17, 1
      %s25 = ssub.s32 %s17, %s24
      %p26 = scmp.eq.s32.totalorder %s25, 0
      %s28 = sadd.s32 %s27, 1
      %s29 = scalar_select %p26, %s27, %s28
      %p32 = pneg %p26
      %p33 = scmp.eq.s32.totalorder %s17, 1
      %p34 = por %p32, %p33
      %p35 = scmp.ne.s32.totalorder %s27, %s30
      %p36 = scmp.eq.s32.totalorder %s17, 0
      %p37 = por %p35, %p36
      %p38 = scmp.ne.s32.totalorder %s27, %s30
      %p39 = scmp.eq.s32.totalorder %s22, 1
      %p40 = por %p38, %p39
      %p41 = scmp.ne.s32.totalorder %s30, %s31
      %p42 = scmp.eq.s32.totalorder %s22, 0
      %p43 = por %p41, %p42
      %p44 = scmp.ne.s32.totalorder %s30, %s31
      %p45 = scmp.eq.s32.totalorder %s23, 1
      %p46 = por %p44, %p45
      %p48 = scmp.ne.s32.totalorder %s31, %s47
      %p49 = scmp.eq.s32.totalorder %s23, 0
      %p50 = por %p48, %p49
      %s52 = sadd.s32 %s51, 1
      %p55 = scmp.eq.s32.totalorder %s17, 1
      %p56 = scmp.ne.s32.totalorder %s51, %s53
      %p57 = scmp.eq.s32.totalorder %s17, 0
      %p58 = por %p56, %p57
      %p59 = scmp.ne.s32.totalorder %s51, %s53
      %p60 = scmp.eq.s32.totalorder %s22, 1
      %p61 = por %p59, %p60
      %p62 = scmp.ne.s32.totalorder %s53, %s54
      %p63 = scmp.eq.s32.totalorder %s22, 0
      %p64 = por %p62, %p63
      %p65 = scmp.ne.s32.totalorder %s53, %s54
      %p66 = scmp.eq.s32.totalorder %s23, 1
      %p67 = por %p65, %p66
      %p69 = scmp.ne.s32.totalorder %s54, %s68
      %p70 = scmp.eq.s32.totalorder %s23, 0
      %p71 = por %p69, %p70
      %s73 = sadd.s32 %s72, 1
      %p76 = scmp.eq.s32.totalorder %s17, 1
      %p77 = scmp.ne.s32.totalorder %s72, %s74
      %p78 = scmp.eq.s32.totalorder %s17, 0
      %p79 = por %p77, %p78
      %p80 = scmp.ne.s32.totalorder %s72, %s74
      %p81 = scmp.eq.s32.totalorder %s22, 1
      %p82 = por %p80, %p81
      %p83 = scmp.ne.s32.totalorder %s74, %s75
      %p84 = scmp.eq.s32.totalorder %s22, 0
      %p85 = por %p83, %p84
      %p86 = scmp.ne.s32.totalorder %s74, %s75
      %p87 = scmp.eq.s32.totalorder %s23, 1
      %p88 = por %p86, %p87
      %p90 = scmp.ne.s32.totalorder %s75, %s89
      %p91 = scmp.eq.s32.totalorder %s23, 0
      %p92 = por %p90, %p91
      %s94 = sadd.s32 %s93, 1
      %p97 = scmp.eq.s32.totalorder %s17, 1
      %p98 = scmp.ne.s32.totalorder %s93, %s95
      %p99 = scmp.eq.s32.totalorder %s17, 0
      %p100 = por %p98, %p99
      %p101 = scmp.ne.s32.totalorder %s93, %s95
      %p102 = scmp.eq.s32.totalorder %s22, 1
      %p103 = por %p101, %p102
      %p104 = scmp.ne.s32.totalorder %s95, %s96
      %p105 = scmp.eq.s32.totalorder %s22, 0
      %p106 = por %p104, %p105
      %p107 = scmp.ne.s32.totalorder %s95, %s96
      %p108 = scmp.eq.s32.totalorder %s23, 1
      %p109 = por %p107, %p108
      %p111 = scmp.ne.s32.totalorder %s96, %s110
      %p112 = scmp.eq.s32.totalorder %s23, 0
      %p113 = por %p111, %p112
      %s115 = sadd.s32 %s114, 1
      %p118 = scmp.eq.s32.totalorder %s17, 1
      %p119 = scmp.ne.s32.totalorder %s114, %s116
      %p120 = scmp.eq.s32.totalorder %s17, 0
      %p121 = por %p119, %p120
      %p122 = scmp.ne.s32.totalorder %s114, %s116
      %p123 = scmp.eq.s32.totalorder %s22, 1
      %p124 = por %p122, %p123
      %p125 = scmp.ne.s32.totalorder %s116, %s117
      %p126 = scmp.eq.s32.totalorder %s22, 0
      %p127 = por %p125, %p126
      %p128 = scmp.ne.s32.totalorder %s116, %s117
      %p129 = scmp.eq.s32.totalorder %s23, 1
      %p130 = por %p128, %p129
      %p132 = scmp.ne.s32.totalorder %s117, %s131
      %p133 = scmp.eq.s32.totalorder %s23, 0
      %p134 = por %p132, %p133
      %s136 = sadd.s32 %s135, 1
      %p139 = scmp.eq.s32.totalorder %s17, 1
      %p140 = scmp.ne.s32.totalorder %s135, %s137
      %p141 = scmp.eq.s32.totalorder %s17, 0
      %p142 = por %p140, %p141
      %p143 = scmp.ne.s32.totalorder %s135, %s137
      %p144 = scmp.eq.s32.totalorder %s22, 1
      %p145 = por %p143, %p144
      %p146 = scmp.ne.s32.totalorder %s137, %s138
      %p147 = scmp.eq.s32.totalorder %s22, 0
      %p148 = por %p146, %p147
      %p149 = scmp.ne.s32.totalorder %s137, %s138
      %p150 = scmp.eq.s32.totalorder %s23, 1
      %p151 = por %p149, %p150
      %p153 = scmp.ne.s32.totalorder %s138, %s152
      %p154 = scmp.eq.s32.totalorder %s23, 0
      %p155 = por %p153, %p154
      %s156 = ssub.s32 %s17, %s24
      %p157 = scmp.eq.s32.totalorder %s156, 0
      %s159 = sadd.s32 %s158, 1
      %s160 = scalar_select %p157, %s158, %s159
      %p163 = pneg %p157
      %p164 = scmp.eq.s32.totalorder %s17, 1
      %p165 = por %p163, %p164
      %p166 = scmp.ne.s32.totalorder %s158, %s161
      %p167 = scmp.eq.s32.totalorder %s17, 0
      %p168 = por %p166, %p167
      %p169 = scmp.ne.s32.totalorder %s158, %s161
      %p170 = scmp.eq.s32.totalorder %s22, 1
      %p171 = por %p169, %p170
      %p172 = scmp.ne.s32.totalorder %s161, %s162
      %p173 = scmp.eq.s32.totalorder %s22, 0
      %p174 = por %p172, %p173
      %p175 = scmp.ne.s32.totalorder %s161, %s162
      %p176 = scmp.eq.s32.totalorder %s23, 1
      %p177 = por %p175, %p176
      %p179 = scmp.ne.s32.totalorder %s162, %s178
      %p180 = scmp.eq.s32.totalorder %s23, 0
      %p181 = por %p179, %p180
      %p182 = scmp.le.s32.totalorder 1, %s17
      %p183 = scmp.lt.s32.totalorder %s17, 3
      %p184 = pnand %p182, %p183
      %p185 = pneg %p184
      // Predicated region
      $region9: #{tpu_custom_call.1} parent=5 // pred_check
        _
      $region10: #{tpu_custom_call.1} parent=5 // pred_check_branch
        %187 = sbr.rel (%p184) target = $region12
      $region11: #{tpu_custom_call.1} parent=5 // pred_region
        %s188 = ssub.s32 %s17, 1
        // Predicated region
        $region13: #{tpu_custom_call.1} parent=11 // pred_check
          %p189 = pneg %p64
        $region14: #{tpu_custom_call.1} parent=11 // pred_check_branch
          %191 = sbr.rel (%p189) target = $region16
        $region15: #{tpu_custom_call.1} parent=11 // pred_region
          %s193 = ssub.s32 6912, 6912
          %194 = vsyncadd [#allocation6], %s193
          %s195 = sshll.u32 [#allocation5], 4
          %s196 = int_to_ptr.vmem [resolvable:$true] %s195
          %201 = dma.hbm_to_vmem [thread:$0]  %s1, 6912, %s196, [#allocation6], 256, 256, 16
        $region16: #{tpu_custom_call.1} parent=11 // pred_fallthru
          _
        // Predicated region
        $region17: #{tpu_custom_call.1} parent=11 // pred_check
          %p202 = pneg %p85
        $region18: #{tpu_custom_call.1} parent=11 // pred_check_branch
          %204 = sbr.rel (%p202) target = $region20
        $region19: #{tpu_custom_call.1} parent=11 // pred_region
          _
        $region20: #{tpu_custom_call.1} parent=11 // pred_fallthru
          _
        // Predicated region
        $region21: #{tpu_custom_call.1} parent=11 // pred_check
          %p205 = pneg %p106
        $region22: #{tpu_custom_call.1} parent=11 // pred_check_branch
          %207 = sbr.rel (%p205) target = $region24
        $region23: #{tpu_custom_call.1} parent=11 // pred_region
          _
        $region24: #{tpu_custom_call.1} parent=11 // pred_fallthru
          _
        // Predicated region
        $region25: #{tpu_custom_call.1} parent=11 // pred_check
          %p208 = pneg %p127
        $region26: #{tpu_custom_call.1} parent=11 // pred_check_branch
          %210 = sbr.rel (%p208) target = $region28
        $region27: #{tpu_custom_call.1} parent=11 // pred_region
          _
        $region28: #{tpu_custom_call.1} parent=11 // pred_fallthru
          _
        // Predicated region
        $region29: #{tpu_custom_call.1} parent=11 // pred_check
          %p211 = pneg %p148
        $region30: #{tpu_custom_call.1} parent=11 // pred_check_branch
          %213 = sbr.rel (%p211) target = $region32
        $region31: #{tpu_custom_call.1} parent=11 // pred_region
          _
        $region32: #{tpu_custom_call.1} parent=11 // pred_fallthru
          _
      $region12: #{tpu_custom_call.1} parent=5 // pred_fallthru
        _
      %p214 = scmp.lt.s32.totalorder %s17, 2
      // Predicated region
      $region33: #{tpu_custom_call.1} parent=5 // pred_check
        %p215 = pneg %p214
      $region34: #{tpu_custom_call.1} parent=5 // pred_check_branch
        %217 = sbr.rel (%p215) target = $region36
      $region35: #{tpu_custom_call.1} parent=5 // pred_region
        // Predicated region
        $region37: #{tpu_custom_call.1} parent=35 // pred_check
          %p218 = pneg %p37
        $region38: #{tpu_custom_call.1} parent=35 // pred_check_branch
          %220 = sbr.rel (%p218) target = $region40
        $region39: #{tpu_custom_call.1} parent=35 // pred_region
          %p221 = scmp.lt.s32.totalorder %s17, 1
          %s222 = scalar_select %p221, %s17, 1
          %s223 = smul.addr %s222, 2
          %s224 = smul.addr %s223, 4
          %s225 = scalar_lea.vmem %s0, %s224
        $region40: #{tpu_custom_call.1} parent=35 // pred_fallthru
          _
      $region36: #{tpu_custom_call.1} parent=5 // pred_fallthru
        _
      %p226 = scmp.le.s32.totalorder 1, %s17
      %p227 = scmp.lt.s32.totalorder %s17, 3
      %p228 = pnand %p226, %p227
      %p229 = pneg %p228
      // Predicated region
      $region41: #{tpu_custom_call.1} parent=5 // pred_check
        _
      $region42: #{tpu_custom_call.1} parent=5 // pred_check_branch
        %231 = sbr.rel (%p228) target = $region44
      $region43: #{tpu_custom_call.1} parent=5 // pred_region
        %s232 = ssub.s32 %s17, 1
        // Predicated region
        $region45: #{tpu_custom_call.1} parent=43 // pred_check
          %p233 = pneg %p64
        $region46: #{tpu_custom_call.1} parent=43 // pred_check_branch
          %235 = sbr.rel (%p233) target = $region48
        $region47: #{tpu_custom_call.1} parent=43 // pred_region
          %236 = dma.done [#allocation6], 6912
        $region48: #{tpu_custom_call.1} parent=43 // pred_fallthru
          _
        %p237 = scmp.lt.s32.totalorder %s22, 1
        %s238 = scalar_select %p237, %s22, 1
        %s239 = smul.addr %s238, 2
        %s240 = smul.addr %s239, 4
        %s241 = scalar_lea.vmem %s0, %s240
        %p242 = pneg %p43
        %p243 = pneg %p40
        %p244 = pneg %p64
        %p245 = pneg %p61
        %p246 = pneg %p85
        %p247 = pneg %p82
        %p248 = pneg %p106
        %p249 = pneg %p103
        %p250 = pneg %p127
        %p251 = pneg %p124
        %p252 = pneg %p148
        %p253 = pneg %p145
        %p254 = pneg %p174
        %p255 = pneg %p171
        %s256 = sand.u32 %s161, 1
        %s257 = scalar_lea.sflag [#allocation7], %s256
        %s258 = sand.u32 %s161, 1
        %s259 = smul.addr %s258, 8
        %s260 = scalar_lea.vmem [#allocation8], %s259
        %p261 = scmp.lt.s32.totalorder %s22, 1
        %s262 = scalar_select %p261, %s22, 1
        %s263 = smul.addr %s262, 2
        %s264 = smul.addr %s263, 4
        %s265 = scalar_lea.vmem %s0, %s264
        %v266 = vld [vmem:[%s265] sm:$0xff]
        %v268 = vcombine.high %v266, %v266
        %vm270 = vcmask 1043456
        %v271 = vsel %vm270, %v266, 0.0
        %v272 = vsel %vm270, %v268, 0.0
        %273 = vrot.lane.b32.xlu0 %v271, 73
        %v274 = vpop.permute.xlu0 %273
        %275 = vrot.lane.b32.xlu0 %v272, 73
        %v276 = vpop.permute.xlu0 %275
        %v277 = vlaneseq
        %v278 = vand.u32 %v277, 127
        %vm279 = vcmp.lt.s32.totalorder %v278, 73
        %v280 = vsel %vm279, %v274, %v276
        %v281 = vsel %vm279, %v276, %v274
        %v282 = vld [vmem:[#allocation5] sm:$0xff]
        %v283 = vld [vmem:[#allocation5 + $0x8] sm:$0xff]
        %v284 = vmul.f32 %v281, %v282
        %v285 = vmul.f32 %v280, %v283
        %286 = vst [vmem:[#allocation2] sm:$0xff] %v284
        %287 = vst [vmem:[#allocation2 + $0x8] sm:$0xff] %v285
        %288 = vrot.lane.b32.xlu0 %v271, 72
        %v289 = vpop.permute.xlu0 %288
        %290 = vrot.lane.b32.xlu0 %v272, 72
        %v291 = vpop.permute.xlu0 %290
        %vm292 = vcmp.lt.s32.totalorder %v278, 72
        %v293 = vsel %vm292, %v289, %v291
        %v294 = vsel %vm292, %v291, %v289
        %v295 = vld [vmem:[#allocation5 + $0x10] sm:$0xff]
        %v296 = vld [vmem:[#allocation5 + $0x18] sm:$0xff]
        %v297 = vmul.f32 %v294, %v295
        %v298 = vmul.f32 %v293, %v296
        %299 = vst [vmem:[#allocation2 + $0x10] sm:$0xff] %v297
        %300 = vst [vmem:[#allocation2 + $0x18] sm:$0xff] %v298
        %301 = vrot.lane.b32.xlu0 %v271, 71
        %v302 = vpop.permute.xlu0 %301
        %303 = vrot.lane.b32.xlu0 %v272, 71
        %v304 = vpop.permute.xlu0 %303
        %vm305 = vcmp.lt.s32.totalorder %v278, 71
        %v306 = vsel %vm305, %v302, %v304
        %v307 = vsel %vm305, %v304, %v302
        %v308 = vld [vmem:[#allocation5 + $0x20] sm:$0xff]
        %v309 = vld [vmem:[#allocation5 + $0x28] sm:$0xff]
        %v310 = vmul.f32 %v307, %v308
        %v311 = vmul.f32 %v306, %v309
        %312 = vst [vmem:[#allocation2 + $0x20] sm:$0xff] %v310
        %313 = vst [vmem:[#allocation2 + $0x28] sm:$0xff] %v311
        %314 = vrot.lane.b32.xlu0 %v271, 65
        %v315 = vpop.permute.xlu0 %314
        %316 = vrot.lane.b32.xlu0 %v272, 65
        %v317 = vpop.permute.xlu0 %316
        %vm318 = vcmp.lt.s32.totalorder %v278, 65
        %v319 = vsel %vm318, %v315, %v317
        %v320 = vsel %vm318, %v317, %v315
        %v321 = vld [vmem:[#allocation5 + $0x30] sm:$0xff]
        %v322 = vld [vmem:[#allocation5 + $0x38] sm:$0xff]
        %v323 = vmul.f32 %v320, %v321
        %v324 = vmul.f32 %v319, %v322
        %325 = vst [vmem:[#allocation2 + $0x30] sm:$0xff] %v323
        %326 = vst [vmem:[#allocation2 + $0x38] sm:$0xff] %v324
        %327 = vrot.lane.b32.xlu0 %v271, 64
        %v328 = vpop.permute.xlu0 %327
        %329 = vrot.lane.b32.xlu0 %v272, 64
        %v330 = vpop.permute.xlu0 %329
        %vm331 = vcmp.lt.s32.totalorder %v278, 64
        %v332 = vsel %vm331, %v328, %v330
        %v333 = vsel %vm331, %v330, %v328
        %v334 = vld [vmem:[#allocation5 + $0x40] sm:$0xff]
        %v335 = vld [vmem:[#allocation5 + $0x48] sm:$0xff]
        %v336 = vmul.f32 %v333, %v334
        %v337 = vmul.f32 %v332, %v335
        %338 = vst [vmem:[#allocation2 + $0x40] sm:$0xff] %v336
        %339 = vst [vmem:[#allocation2 + $0x48] sm:$0xff] %v337
        %340 = vrot.lane.b32.xlu0 %v271, 63
        %v341 = vpop.permute.xlu0 %340
        %342 = vrot.lane.b32.xlu0 %v272, 63
        %v343 = vpop.permute.xlu0 %342
        %vm344 = vcmp.lt.s32.totalorder %v278, 63
        %v345 = vsel %vm344, %v341, %v343
        %v346 = vsel %vm344, %v343, %v341
        %v347 = vld [vmem:[#allocation5 + $0x50] sm:$0xff]
        %v348 = vld [vmem:[#allocation5 + $0x58] sm:$0xff]
        %v349 = vmul.f32 %v346, %v347
        %v350 = vmul.f32 %v345, %v348
        %351 = vst [vmem:[#allocation2 + $0x50] sm:$0xff] %v349
        %352 = vst [vmem:[#allocation2 + $0x58] sm:$0xff] %v350
        %353 = vrot.lane.b32.xlu0 %v271, 57
        %v354 = vpop.permute.xlu0 %353
        %355 = vrot.lane.b32.xlu0 %v272, 57
        %v356 = vpop.permute.xlu0 %355
        %vm357 = vcmp.lt.s32.totalorder %v278, 57
        %v358 = vsel %vm357, %v354, %v356
        %v359 = vsel %vm357, %v356, %v354
        %v360 = vld [vmem:[#allocation5 + $0x60] sm:$0xff]
        %v361 = vld [vmem:[#allocation5 + $0x68] sm:$0xff]
        %v362 = vmul.f32 %v359, %v360
        %v363 = vmul.f32 %v358, %v361
        %364 = vst [vmem:[#allocation2 + $0x60] sm:$0xff] %v362
        %365 = vst [vmem:[#allocation2 + $0x68] sm:$0xff] %v363
        %366 = vrot.lane.b32.xlu0 %v271, 56
        %v367 = vpop.permute.xlu0 %366
        %368 = vrot.lane.b32.xlu0 %v272, 56
        %v369 = vpop.permute.xlu0 %368
        %vm370 = vcmp.lt.s32.totalorder %v278, 56
        %v371 = vsel %vm370, %v367, %v369
        %v372 = vsel %vm370, %v369, %v367
        %v373 = vld [vmem:[#allocation5 + $0x70] sm:$0xff]
        %v374 = vld [vmem:[#allocation5 + $0x78] sm:$0xff]
        %v375 = vmul.f32 %v372, %v373
        %v376 = vmul.f32 %v371, %v374
        %377 = vst [vmem:[#allocation2 + $0x70] sm:$0xff] %v375
        %378 = vst [vmem:[#allocation2 + $0x78] sm:$0xff] %v376
        %379 = vrot.lane.b32.xlu0 %v271, 55
        %v380 = vpop.permute.xlu0 %379
        %381 = vrot.lane.b32.xlu0 %v272, 55
        %v382 = vpop.permute.xlu0 %381
        %vm383 = vcmp.lt.s32.totalorder %v278, 55
        %v384 = vsel %vm383, %v380, %v382
        %v385 = vsel %vm383, %v382, %v380
        %v386 = vld [vmem:[#allocation5 + $0x80] sm:$0xff]
        %v387 = vld [vmem:[#allocation5 + $0x88] sm:$0xff]
        %v388 = vmul.f32 %v385, %v386
        %v389 = vmul.f32 %v384, %v387
        %390 = vst [vmem:[#allocation2 + $0x80] sm:$0xff] %v388
        %391 = vst [vmem:[#allocation2 + $0x88] sm:$0xff] %v389
        %392 = vrot.lane.b32.xlu0 %v271, 9
        %v393 = vpop.permute.xlu0 %392
        %394 = vrot.lane.b32.xlu0 %v272, 9
        %v395 = vpop.permute.xlu0 %394
        %vm396 = vcmp.lt.s32.totalorder %v278, 9
        %v397 = vsel %vm396, %v393, %v395
        %v398 = vsel %vm396, %v395, %v393
        %v399 = vld [vmem:[#allocation5 + $0x90] sm:$0xff]
        %v400 = vld [vmem:[#allocation5 + $0x98] sm:$0xff]
        %v401 = vmul.f32 %v398, %v399
        %v402 = vmul.f32 %v397, %v400
        %403 = vst [vmem:[#allocation2 + $0x90] sm:$0xff] %v401
        %404 = vst [vmem:[#allocation2 + $0x98] sm:$0xff] %v402
        %405 = vrot.lane.b32.xlu0 %v271, 8
        %v406 = vpop.permute.xlu0 %405
        %407 = vrot.lane.b32.xlu0 %v272, 8
        %v408 = vpop.permute.xlu0 %407
        %vm409 = vcmp.lt.s32.totalorder %v278, 8
        %v410 = vsel %vm409, %v406, %v408
        %v411 = vsel %vm409, %v408, %v406
        %v412 = vld [vmem:[#allocation5 + $0xa0] sm:$0xff]
        %v413 = vld [vmem:[#allocation5 + $0xa8] sm:$0xff]
        %v414 = vmul.f32 %v411, %v412
        %v415 = vmul.f32 %v410, %v413
        %416 = vst [vmem:[#allocation2 + $0xa0] sm:$0xff] %v414
        %417 = vst [vmem:[#allocation2 + $0xa8] sm:$0xff] %v415
        %418 = vrot.lane.b32.xlu0 %v271, 7
        %v419 = vpop.permute.xlu0 %418
        %420 = vrot.lane.b32.xlu0 %v272, 7
        %v421 = vpop.permute.xlu0 %420
        %vm422 = vcmp.lt.s32.totalorder %v278, 7
        %v423 = vsel %vm422, %v419, %v421
        %v424 = vsel %vm422, %v421, %v419
        %v425 = vld [vmem:[#allocation5 + $0xb0] sm:$0xff]
        %v426 = vld [vmem:[#allocation5 + $0xb8] sm:$0xff]
        %v427 = vmul.f32 %v424, %v425
        %v428 = vmul.f32 %v423, %v426
        %429 = vst [vmem:[#allocation2 + $0xb0] sm:$0xff] %v427
        %430 = vst [vmem:[#allocation2 + $0xb8] sm:$0xff] %v428
        %431 = vrot.lane.b32.xlu0 %v271, 1
        %v432 = vpop.permute.xlu0 %431
        %433 = vrot.lane.b32.xlu0 %v272, 1
        %v434 = vpop.permute.xlu0 %433
        %vm435 = vcmp.lt.s32.totalorder %v278, 1
        %v436 = vsel %vm435, %v432, %v434
        %v437 = vsel %vm435, %v434, %v432
        %v438 = vld [vmem:[#allocation5 + $0xc0] sm:$0xff]
        %v439 = vld [vmem:[#allocation5 + $0xc8] sm:$0xff]
        %v440 = vmul.f32 %v437, %v438
        %v441 = vmul.f32 %v436, %v439
        %442 = vst [vmem:[#allocation2 + $0xc0] sm:$0xff] %v440
        %443 = vst [vmem:[#allocation2 + $0xc8] sm:$0xff] %v441
        %444 = vst [vmem:[#allocation2 + $0xd0] sm:$0xff] %v271
        %445 = vst [vmem:[#allocation2 + $0xd8] sm:$0xff] %v272
        %446 = vrot.lane.b32.xlu0 %v271, 127
        %v447 = vpop.permute.xlu0 %446
        %448 = vrot.lane.b32.xlu0 %v272, 127
        %v449 = vpop.permute.xlu0 %448
        %vm450 = vcmp.lt.s32.totalorder %v278, 127
        %v451 = vsel %vm450, %v447, %v449
        %v452 = vsel %vm450, %v449, %v447
        %v453 = vld [vmem:[#allocation5 + $0xe0] sm:$0xff]
        %v454 = vld [vmem:[#allocation5 + $0xe8] sm:$0xff]
        %v455 = vmul.f32 %v451, %v453
        %v456 = vmul.f32 %v452, %v454
        %457 = vst [vmem:[#allocation2 + $0xe0] sm:$0xff] %v455
        %458 = vst [vmem:[#allocation2 + $0xe8] sm:$0xff] %v456
        %459 = vrot.lane.b32.xlu0 %v271, 121
        %v460 = vpop.permute.xlu0 %459
        %461 = vrot.lane.b32.xlu0 %v272, 121
        %v462 = vpop.permute.xlu0 %461
        %vm463 = vcmp.lt.s32.totalorder %v278, 121
        %v464 = vsel %vm463, %v460, %v462
        %v465 = vsel %vm463, %v462, %v460
        %v466 = vld [vmem:[#allocation5 + $0xf0] sm:$0xff]
        %v467 = vld [vmem:[#allocation5 + $0xf8] sm:$0xff]
        %v468 = vmul.f32 %v464, %v466
        %v469 = vmul.f32 %v465, %v467
        %470 = vst [vmem:[#allocation2 + $0xf0] sm:$0xff] %v468
        %471 = vst [vmem:[#allocation2 + $0xf8] sm:$0xff] %v469
        %472 = vrot.lane.b32.xlu0 %v271, 120
        %v473 = vpop.permute.xlu0 %472
        %474 = vrot.lane.b32.xlu0 %v272, 120
        %v475 = vpop.permute.xlu0 %474
        %vm476 = vcmp.lt.s32.totalorder %v278, 120
        %v477 = vsel %vm476, %v473, %v475
        %v478 = vsel %vm476, %v475, %v473
        %v479 = vld [vmem:[#allocation5 + $0x100] sm:$0xff]
        %v480 = vld [vmem:[#allocation5 + $0x108] sm:$0xff]
        %v481 = vmul.f32 %v477, %v479
        %v482 = vmul.f32 %v478, %v480
        %483 = vst [vmem:[#allocation2 + $0x100] sm:$0xff] %v481
        %484 = vst [vmem:[#allocation2 + $0x108] sm:$0xff] %v482
        %485 = vrot.lane.b32.xlu0 %v271, 119
        %v486 = vpop.permute.xlu0 %485
        %487 = vrot.lane.b32.xlu0 %v272, 119
        %v488 = vpop.permute.xlu0 %487
        %vm489 = vcmp.lt.s32.totalorder %v278, 119
        %v490 = vsel %vm489, %v486, %v488
        %v491 = vsel %vm489, %v488, %v486
        %v492 = vld [vmem:[#allocation5 + $0x110] sm:$0xff]
        %v493 = vld [vmem:[#allocation5 + $0x118] sm:$0xff]
        %v494 = vmul.f32 %v490, %v492
        %v495 = vmul.f32 %v491, %v493
        %496 = vst [vmem:[#allocation2 + $0x110] sm:$0xff] %v494
        %497 = vst [vmem:[#allocation2 + $0x118] sm:$0xff] %v495
        %v498 = vld [vmem:[#allocation5 + $0x120] sm:$0xff]
        %v499 = vld [vmem:[#allocation5 + $0x128] sm:$0xff]
        %v500 = vmul.f32 %v280, %v498
        %v501 = vmul.f32 %v281, %v499
        %502 = vst [vmem:[#allocation2 + $0x120] sm:$0xff] %v500
        %503 = vst [vmem:[#allocation2 + $0x128] sm:$0xff] %v501
        %v504 = vld [vmem:[#allocation5 + $0x130] sm:$0xff]
        %v505 = vld [vmem:[#allocation5 + $0x138] sm:$0xff]
        %v506 = vmul.f32 %v293, %v504
        %v507 = vmul.f32 %v294, %v505
        %508 = vst [vmem:[#allocation2 + $0x130] sm:$0xff] %v506
        %509 = vst [vmem:[#allocation2 + $0x138] sm:$0xff] %v507
        %v510 = vld [vmem:[#allocation5 + $0x140] sm:$0xff]
        %v511 = vld [vmem:[#allocation5 + $0x148] sm:$0xff]
        %v512 = vmul.f32 %v306, %v510
        %v513 = vmul.f32 %v307, %v511
        %514 = vst [vmem:[#allocation2 + $0x140] sm:$0xff] %v512
        %515 = vst [vmem:[#allocation2 + $0x148] sm:$0xff] %v513
        %v516 = vld [vmem:[#allocation5 + $0x150] sm:$0xff]
        %v517 = vld [vmem:[#allocation5 + $0x158] sm:$0xff]
        %v518 = vmul.f32 %v319, %v516
        %v519 = vmul.f32 %v320, %v517
        %520 = vst [vmem:[#allocation2 + $0x150] sm:$0xff] %v518
        %521 = vst [vmem:[#allocation2 + $0x158] sm:$0xff] %v519
        %v522 = vld [vmem:[#allocation5 + $0x160] sm:$0xff]
        %v523 = vld [vmem:[#allocation5 + $0x168] sm:$0xff]
        %v524 = vmul.f32 %v332, %v522
        %v525 = vmul.f32 %v333, %v523
        %526 = vst [vmem:[#allocation2 + $0x160] sm:$0xff] %v524
        %527 = vst [vmem:[#allocation2 + $0x168] sm:$0xff] %v525
        %v528 = vld [vmem:[#allocation5 + $0x170] sm:$0xff]
        %v529 = vld [vmem:[#allocation5 + $0x178] sm:$0xff]
        %v530 = vmul.f32 %v345, %v528
        %v531 = vmul.f32 %v346, %v529
        %532 = vst [vmem:[#allocation2 + $0x170] sm:$0xff] %v530
        %533 = vst [vmem:[#allocation2 + $0x178] sm:$0xff] %v531
        %v534 = vld [vmem:[#allocation5 + $0x180] sm:$0xff]
        %v535 = vld [vmem:[#allocation5 + $0x188] sm:$0xff]
        %v536 = vmul.f32 %v358, %v534
        %v537 = vmul.f32 %v359, %v535
        %538 = vst [vmem:[#allocation2 + $0x180] sm:$0xff] %v536
        %539 = vst [vmem:[#allocation2 + $0x188] sm:$0xff] %v537
        %v540 = vld [vmem:[#allocation5 + $0x190] sm:$0xff]
        %v541 = vld [vmem:[#allocation5 + $0x198] sm:$0xff]
        %v542 = vmul.f32 %v371, %v540
        %v543 = vmul.f32 %v372, %v541
        %544 = vst [vmem:[#allocation2 + $0x190] sm:$0xff] %v542
        %545 = vst [vmem:[#allocation2 + $0x198] sm:$0xff] %v543
        %v546 = vld [vmem:[#allocation5 + $0x1a0] sm:$0xff]
        %v547 = vld [vmem:[#allocation5 + $0x1a8] sm:$0xff]
        %v548 = vmul.f32 %v384, %v546
        %v549 = vmul.f32 %v385, %v547
        %550 = vst [vmem:[#allocation2 + $0x1a0] sm:$0xff] %v548
        %551 = vst [vmem:[#allocation2 + $0x1a8] sm:$0xff] %v549
        %v552 = vld [vmem:[%s2] sm:$0xff]
        %v553 = vld [vmem:[%s2 + $0x8] sm:$0xff]
        %v554 = vld [vmem:[#allocation2] sm:$0xff]
        %v555 = vld [vmem:[#allocation2 + $0x8] sm:$0xff]
        %v556 = vld [vmem:[#allocation2 + $0x10] sm:$0xff]
        %v557 = vld [vmem:[#allocation2 + $0x18] sm:$0xff]
        %v558 = vld [vmem:[#allocation2 + $0x20] sm:$0xff]
        %v559 = vld [vmem:[#allocation2 + $0x28] sm:$0xff]
        %v560 = vld [vmem:[#allocation2 + $0x30] sm:$0xff]
        %v561 = vld [vmem:[#allocation2 + $0x38] sm:$0xff]
        %v562 = vld [vmem:[#allocation2 + $0x40] sm:$0xff]
        %v563 = vld [vmem:[#allocation2 + $0x48] sm:$0xff]
        %v564 = vld [vmem:[#allocation2 + $0x50] sm:$0xff]
        %v565 = vld [vmem:[#allocation2 + $0x58] sm:$0xff]
        %v566 = vld [vmem:[#allocation2 + $0x60] sm:$0xff]
        %v567 = vld [vmem:[#allocation2 + $0x68] sm:$0xff]
        %v568 = vld [vmem:[#allocation2 + $0x70] sm:$0xff]
        %v569 = vld [vmem:[#allocation2 + $0x78] sm:$0xff]
        %v570 = vld [vmem:[#allocation2 + $0x80] sm:$0xff]
        %v571 = vld [vmem:[#allocation2 + $0x88] sm:$0xff]
        %v572 = vld [vmem:[#allocation2 + $0x90] sm:$0xff]
        %v573 = vld [vmem:[#allocation2 + $0x98] sm:$0xff]
        %v574 = vld [vmem:[#allocation2 + $0xa0] sm:$0xff]
        %v575 = vld [vmem:[#allocation2 + $0xa8] sm:$0xff]
        %v576 = vld [vmem:[#allocation2 + $0xb0] sm:$0xff]
        %v577 = vld [vmem:[#allocation2 + $0xb8] sm:$0xff]
        %v578 = vld [vmem:[#allocation2 + $0xc0] sm:$0xff]
        %v579 = vld [vmem:[#allocation2 + $0xc8] sm:$0xff]
        %v580 = vld [vmem:[#allocation2 + $0xd0] sm:$0xff]
        %v581 = vld [vmem:[#allocation2 + $0xd8] sm:$0xff]
        %v582 = vld [vmem:[#allocation2 + $0xe0] sm:$0xff]
        %v583 = vld [vmem:[#allocation2 + $0xe8] sm:$0xff]
        %v584 = vld [vmem:[#allocation2 + $0xf0] sm:$0xff]
        %v585 = vld [vmem:[#allocation2 + $0xf8] sm:$0xff]
        %v586 = vld [vmem:[#allocation2 + $0x100] sm:$0xff]
        %v587 = vld [vmem:[#allocation2 + $0x108] sm:$0xff]
        %v588 = vld [vmem:[#allocation2 + $0x110] sm:$0xff]
        %v589 = vld [vmem:[#allocation2 + $0x118] sm:$0xff]
        %v590 = vld [vmem:[#allocation2 + $0x120] sm:$0xff]
        %v591 = vld [vmem:[#allocation2 + $0x128] sm:$0xff]
        %v592 = vld [vmem:[#allocation2 + $0x130] sm:$0xff]
        %v593 = vld [vmem:[#allocation2 + $0x138] sm:$0xff]
        %v594 = vld [vmem:[#allocation2 + $0x140] sm:$0xff]
        %v595 = vld [vmem:[#allocation2 + $0x148] sm:$0xff]
        %v596 = vld [vmem:[#allocation2 + $0x150] sm:$0xff]
        %v597 = vld [vmem:[#allocation2 + $0x158] sm:$0xff]
        %v598 = vld [vmem:[#allocation2 + $0x160] sm:$0xff]
        %v599 = vld [vmem:[#allocation2 + $0x168] sm:$0xff]
        %v600 = vld [vmem:[#allocation2 + $0x170] sm:$0xff]
        %v601 = vld [vmem:[#allocation2 + $0x178] sm:$0xff]
        %v602 = vld [vmem:[#allocation2 + $0x180] sm:$0xff]
        %v603 = vld [vmem:[#allocation2 + $0x188] sm:$0xff]
        %v604 = vld [vmem:[#allocation2 + $0x190] sm:$0xff]
        %v605 = vld [vmem:[#allocation2 + $0x198] sm:$0xff]
        %v606 = vld [vmem:[#allocation2 + $0x1a0] sm:$0xff]
        %v607 = vld [vmem:[#allocation2 + $0x1a8] sm:$0xff]
        %v608 = vld [vmem:[%s3] sm:$0xff]
        %610 = vset.pattern.permute.xlu0 0
        %611 = vperm.xlu0 %610, %v608
        %v612 = vpop.permute.xlu0 %611
        %vm614 = vcmask 719872
        %v616 = vsel %vm614, %v553, 0
        %618 = vmatprep.subr.mxu0 %v555
        %619 = vmatpush1.msra.mxu0 %v554
        %620 = vmatprep.subr.mxu0 %v557
        %621 = vmatpush1.msra.mxu0 %v556
        %622 = vmatprep.subr.mxu0 %v559
        %623 = vmatpush1.msra.mxu0 %v558
        %624 = vmatprep.subr.mxu0 %v561
        %625 = vmatpush1.msra.mxu0 %v560
        %626 = vmatprep.subr.mxu0 %v563
        %627 = vmatpush1.msra.mxu0 %v562
        %628 = vmatprep.subr.mxu0 %v565
        %629 = vmatpush1.msra.mxu0 %v564
        %630 = vmatprep.subr.mxu0 %v567
        %631 = vmatpush1.msra.mxu0 %v566
        %632 = vmatprep.subr.mxu0 %v569
        %633 = vmatpush1.msra.mxu0 %v568
        %634 = vmatprep.subr.mxu0 %v571
        %635 = vmatpush1.msra.mxu0 %v570
        %636 = vmatprep.subr.mxu0 %v573
        %637 = vmatpush1.msra.mxu0 %v572
        %638 = vmatprep.subr.mxu0 %v575
        %639 = vmatpush1.msra.mxu0 %v574
        %640 = vmatprep.subr.mxu0 %v577
        %641 = vmatpush1.msra.mxu0 %v576
        %642 = vmatprep.subr.mxu0 %v579
        %643 = vmatpush1.msra.mxu0 %v578
        %644 = vmatprep.subr.mxu0 %v581
        %645 = vmatpush1.msra.mxu0 %v580
        %646 = vmatprep.subr.mxu0 %v583
        %647 = vmatpush1.msra.mxu0 %v582
        %648 = vmatprep.subr.mxu0 %v585
        %649 = vmatpush1.msra.mxu0 %v584
        %650 = vmatprep.subr.mxu0 %v587
        %651 = vmatpush1.msra.mxu0 %v586
        %652 = vmatprep.subr.mxu0 %v589
        %653 = vmatpush1.msra.mxu0 %v588
        %654 = vmatprep.subr.mxu0 %v591
        %655 = vmatpush1.msra.mxu0 %v590
        %656 = vmatprep.subr.mxu0 %v593
        %657 = vmatpush1.msra.mxu0 %v592
        %658 = vmatprep.subr.mxu0 %v595
        %659 = vmatpush1.msra.mxu0 %v594
        %660 = vmatprep.subr.mxu0 %v597
        %661 = vmatpush1.msra.mxu0 %v596
        %662 = vmatprep.subr.mxu0 %v599
        %663 = vmatpush1.msra.mxu0 %v598
        %664 = vmatprep.subr.mxu0 %v601
        %665 = vmatpush1.msra.mxu0 %v600
        %666 = vmatprep.subr.mxu0 %v603
        %667 = vmatpush1.msra.mxu0 %v602
        %668 = vmatprep.subr.mxu0 %v605
        %669 = vmatpush1.msra.mxu0 %v604
        %670 = vmatprep.subr.mxu0 %v607
        %671 = vmatpush1.msra.mxu0 %v606
        %672 = vmatprep.subr.mxu0 0.0
        %673 = vmatpush1.msra.mxu0 0.0
        %674 = vmatprep.subr.mxu0 0.0
        %675 = vmatpush1.msra.mxu0 0.0
        %676 = vmatprep.subr.mxu0 0.0
        %677 = vmatpush1.msra.mxu0 0.0
        %678 = vmatprep.subr.mxu0 0.0
        %679 = vmatpush1.msra.mxu0 0.0
        %680 = vmatprep.subr.mxu0 0.0
        %681 = vmatpush1.msra.mxu0 0.0
        %682 = vmatprep.mubr.f32.mxu0 %v616
        %683 = vmatmul.mubr.f32.gmra.mrb[0].mxu0 %v552
        %v684 = vpop.f32.mrb[0].mxu0
        %v685 = vadd.f32 %v612, %v684
        %v686 = vpop.f32.mrb[0].mxu0
        %v687 = vadd.f32 %v612, %v686
        %688 = vdwg.mxu0
        %vm689 = vcmp.ge.f32.partialorder %v685, 0.0
        %vm690 = vcmp.ge.f32.partialorder %v687, 0.0
        %v691 = vmul.f32 %v685, 0.2
        %v692 = vmul.f32 %v687, 0.2
        %v693 = vsel %vm689, %v685, %v691
        %v694 = vsel %vm690, %v687, %v692
        %v695 = vld [vmem:[%s4] sm:$0xff]
        %v696 = vld [vmem:[%s4 + $0x8] sm:$0xff]
        %v697 = vld [vmem:[%s4 + $0x10] sm:$0xff]
        %v698 = vld [vmem:[%s4 + $0x18] sm:$0x7]
        %vm699 = vcmask 64512
        %v701 = vsel %vm699, %v695, 0
        %v704 = vsel %vm699, %v696, 0
        %v707 = vsel %vm699, %v697, 0
        %v710 = vsel %vm699, %v698, 0
        %712 = vmatprep.subr.mxu0 %v694
        %713 = vmatpush1.msra.mxu0 %v693
        %714 = vmatprep.subr.mxu0 0.0
        %715 = vmatpush1.msra.mxu0 0.0
        %716 = vmatprep.subr.mxu0 0.0
        %717 = vmatpush1.msra.mxu0 0.0
        %718 = vmatprep.subr.mxu0 0.0
        %719 = vmatpush1.msra.mxu0 0.0
        %720 = vmatprep.subr.mxu0 0.0
        %721 = vmatpush1.msra.mxu0 0.0
        %722 = vmatprep.subr.mxu0 0.0
        %723 = vmatpush1.msra.mxu0 0.0
        %724 = vmatprep.subr.mxu0 0.0
        %725 = vmatpush1.msra.mxu0 0.0
        %726 = vmatprep.subr.mxu0 0.0
        %727 = vmatpush1.msra.mxu0 0.0
        %728 = vmatprep.subr.mxu0 0.0
        %729 = vmatpush1.msra.mxu0 0.0
        %730 = vmatprep.subr.mxu0 0.0
        %731 = vmatpush1.msra.mxu0 0.0
        %732 = vmatprep.subr.mxu0 0.0
        %733 = vmatpush1.msra.mxu0 0.0
        %734 = vmatprep.subr.mxu0 0.0
        %735 = vmatpush1.msra.mxu0 0.0
        %736 = vmatprep.subr.mxu0 0.0
        %737 = vmatpush1.msra.mxu0 0.0
        %738 = vmatprep.subr.mxu0 0.0
        %739 = vmatpush1.msra.mxu0 0.0
        %740 = vmatprep.subr.mxu0 0.0
        %741 = vmatpush1.msra.mxu0 0.0
        %742 = vmatprep.subr.mxu0 0.0
        %743 = vmatpush1.msra.mxu0 0.0
        %744 = vmatprep.subr.mxu0 0.0
        %745 = vmatpush1.msra.mxu0 0.0
        %746 = vmatprep.subr.mxu0 0.0
        %747 = vmatpush1.msra.mxu0 0.0
        %748 = vmatprep.subr.mxu0 0.0
        %749 = vmatpush1.msra.mxu0 0.0
        %750 = vmatprep.subr.mxu0 0.0
        %751 = vmatpush1.msra.mxu0 0.0
        %752 = vmatprep.subr.mxu0 0.0
        %753 = vmatpush1.msra.mxu0 0.0
        %754 = vmatprep.subr.mxu0 0.0
        %755 = vmatpush1.msra.mxu0 0.0
        %756 = vmatprep.subr.mxu0 0.0
        %757 = vmatpush1.msra.mxu0 0.0
        %758 = vmatprep.subr.mxu0 0.0
        %759 = vmatpush1.msra.mxu0 0.0
        %760 = vmatprep.subr.mxu0 0.0
        %761 = vmatpush1.msra.mxu0 0.0
        %762 = vmatprep.subr.mxu0 0.0
        %763 = vmatpush1.msra.mxu0 0.0
        %764 = vmatprep.subr.mxu0 0.0
        %765 = vmatpush1.msra.mxu0 0.0
        %766 = vmatprep.subr.mxu0 0.0
        %767 = vmatpush1.msra.mxu0 0.0
        %768 = vmatprep.subr.mxu0 0.0
        %769 = vmatpush1.msra.mxu0 0.0
        %770 = vmatprep.subr.mxu0 0.0
        %771 = vmatpush1.msra.mxu0 0.0
        %772 = vmatprep.subr.mxu0 0.0
        %773 = vmatpush1.msra.mxu0 0.0
        %774 = vmatprep.subr.mxu0 0.0
        %775 = vmatpush1.msra.mxu0 0.0
        %776 = vmatprep.mubr.f32.mxu0 0.0
        %777 = vmatmul.mubr.f32.gmra.mrb[0].mxu0 %v701
        %v778 = vpop.f32.mrb[0].mxu0
        %v779 = vadd.f32 0.0, %v778
        %v780 = vpop.f32.mrb[0].mxu0
        %v781 = vadd.f32 0.0, %v780
        %782 = vmatprep.mubr.f32.mxu0 0.0
        %783 = vmatmul.mubr.f32.gmra.mrb[0].mxu0 %v704
        %v784 = vpop.f32.mrb[0].mxu0
        %v785 = vadd.f32 0.0, %v784
        %v786 = vpop.f32.mrb[0].mxu0
        %v787 = vadd.f32 0.0, %v786
        %788 = vmatprep.mubr.f32.mxu0 0.0
        %789 = vmatmul.mubr.f32.gmra.mrb[0].mxu0 %v707
        %v790 = vpop.f32.mrb[0].mxu0
        %v791 = vadd.f32 0.0, %v790
        %v792 = vpop.f32.mrb[0].mxu0
        %v793 = vadd.f32 0.0, %v792
        %794 = vmatprep.mubr.f32.mxu0 0.0
        %795 = vmatmul.mubr.f32.gmra.mrb[0].mxu0 %v710
        %v796 = vpop.f32.mrb[0].mxu0
        %v797 = vadd.f32 0.0, %v796
        %v798 = vpop.f32.mrb[0].mxu0
        %v799 = vadd.f32 0.0, %v798
        %800 = vdwg.mxu0
        %801 = vst [vmem:[#allocation3] sm:$0xff] %v779
        %802 = vst [vmem:[#allocation3 + $0x8] sm:$0xff] %v781
        %803 = vst [vmem:[#allocation3 + $0x10] sm:$0xff] %v785
        %804 = vst [vmem:[#allocation3 + $0x18] sm:$0xff] %v787
        %805 = vst [vmem:[#allocation3 + $0x20] sm:$0xff] %v791
        %806 = vst [vmem:[#allocation3 + $0x28] sm:$0xff] %v793
        %807 = vst [vmem:[#allocation3 + $0x30] sm:$0x7] %v797
        %808 = vst [vmem:[#allocation3 + $0x38] sm:$0x7] %v799
        %s809 = scalar_lea.vmem [#allocation3], 21
        %v810 = vld [vmem:[%s809] ss:$8 sm:$0x3]
        %v811 = vld [vmem:[#allocation3] ss:$8 sm:$0x3]
        %v813 = vlaneseq
        %v814 = vshrl.u32 %v813, 7
        %v815 = vsub.s32 0, %v814
        %v816 = vrot.slane %v811, %v815
        %v817 = vlaneseq
        %v818 = vshrl.u32 %v817, 7
        %v819 = vsub.s32 1, %v818
        %v820 = vrot.slane %v811, %v819
        %823 = vrot.lane.b32.xlu0 %v816, 73
        %v824 = vpop.permute.xlu0 %823
        %825 = vrot.lane.b32.xlu0 %v820, 73
        %v826 = vpop.permute.xlu0 %825
        %v827 = vsel %vm279, %v824, %v826
        %v828 = vsel %vm279, %v826, %v824
        %v829 = vld [vmem:[#allocation5] ss:$8 sm:$0x3]
        %v831 = vlaneseq
        %v832 = vshrl.u32 %v831, 7
        %v833 = vsub.s32 0, %v832
        %v834 = vrot.slane %v829, %v833
        %v835 = vlaneseq
        %v836 = vshrl.u32 %v835, 7
        %v837 = vsub.s32 1, %v836
        %v838 = vrot.slane %v829, %v837
        %v841 = vmul.f32 %v828, %v834
        %v842 = vmul.f32 %v827, %v838
        %v845 = vcombine.low %v841, %v842
        %v847 = vunpack.c.l.s4 1966171168
        %v848 = vunpack.c.0.s8 %v847
        %v849 = vlaneseq
        %v850 = vshrl.u32 %v849, 7
        %v851 = vsub.s32 %v848, %v850
        %v852 = vrot.slane %v845, %v851
        %v854 = vunpack.c.l.s4 1966171168
        %v855 = vunpack.c.0.s8 %v854
        %v856 = vlaneseq
        %v857 = vshrl.u32 %v856, 7
        %v858 = vsub.s32 %v855, %v857
        %v859 = vrot.slane %v852, %v858
        %v861 = vadd.f32 %v810, %v859
        %s862 = scalar_lea.vmem [#allocation3], 1
        %v863 = vld [vmem:[%s862] ss:$8 sm:$0x3]
        %v865 = vlaneseq
        %v866 = vshrl.u32 %v865, 7
        %v867 = vsub.s32 0, %v866
        %v868 = vrot.slane %v863, %v867
        %v869 = vlaneseq
        %v870 = vshrl.u32 %v869, 7
        %v871 = vsub.s32 1, %v870
        %v872 = vrot.slane %v863, %v871
        %875 = vrot.lane.b32.xlu0 %v868, 72
        %v876 = vpop.permute.xlu0 %875
        %877 = vrot.lane.b32.xlu0 %v872, 72
        %v878 = vpop.permute.xlu0 %877
        %v879 = vsel %vm292, %v876, %v878
        %v880 = vsel %vm292, %v878, %v876
        %s881 = scalar_lea.vmem [#allocation5], 16
        %v882 = vld [vmem:[%s881] ss:$8 sm:$0x3]
        %v884 = vlaneseq
        %v885 = vshrl.u32 %v884, 7
        %v886 = vsub.s32 0, %v885
        %v887 = vrot.slane %v882, %v886
        %v888 = vlaneseq
        %v889 = vshrl.u32 %v888, 7
        %v890 = vsub.s32 1, %v889
        %v891 = vrot.slane %v882, %v890
        %v894 = vmul.f32 %v880, %v887
        %v895 = vmul.f32 %v879, %v891
        %v898 = vcombine.low %v894, %v895
        %v900 = vunpack.c.l.s4 1966171168
        %v901 = vunpack.c.0.s8 %v900
        %v902 = vlaneseq
        %v903 = vshrl.u32 %v902, 7
        %v904 = vsub.s32 %v901, %v903
        %v905 = vrot.slane %v898, %v904
        %v907 = vunpack.c.l.s4 1966171168
        %v908 = vunpack.c.0.s8 %v907
        %v909 = vlaneseq
        %v910 = vshrl.u32 %v909, 7
        %v911 = vsub.s32 %v908, %v910
        %v912 = vrot.slane %v905, %v911
        %v914 = vadd.f32 %v861, %v912
        %s915 = scalar_lea.vmem [#allocation3], 2
        %v916 = vld [vmem:[%s915] ss:$8 sm:$0x3]
        %v918 = vlaneseq
        %v919 = vshrl.u32 %v918, 7
        %v920 = vsub.s32 0, %v919
        %v921 = vrot.slane %v916, %v920
        %v922 = vlaneseq
        %v923 = vshrl.u32 %v922, 7
        %v924 = vsub.s32 1, %v923
        %v925 = vrot.slane %v916, %v924
        %928 = vrot.lane.b32.xlu0 %v921, 71
        %v929 = vpop.permute.xlu0 %928
        %930 = vrot.lane.b32.xlu0 %v925, 71
        %v931 = vpop.permute.xlu0 %930
        %v932 = vsel %vm305, %v929, %v931
        %v933 = vsel %vm305, %v931, %v929
        %s934 = scalar_lea.vmem [#allocation5], 32
        %v935 = vld [vmem:[%s934] ss:$8 sm:$0x3]
        %v937 = vlaneseq
        %v938 = vshrl.u32 %v937, 7
        %v939 = vsub.s32 0, %v938
        %v940 = vrot.slane %v935, %v939
        %v941 = vlaneseq
        %v942 = vshrl.u32 %v941, 7
        %v943 = vsub.s32 1, %v942
        %v944 = vrot.slane %v935, %v943
        %v947 = vmul.f32 %v933, %v940
        %v948 = vmul.f32 %v932, %v944
        %v951 = vcombine.low %v947, %v948
        %v953 = vunpack.c.l.s4 1966171168
        %v954 = vunpack.c.0.s8 %v953
        %v955 = vlaneseq
        %v956 = vshrl.u32 %v955, 7
        %v957 = vsub.s32 %v954, %v956
        %v958 = vrot.slane %v951, %v957
        %v960 = vunpack.c.l.s4 1966171168
        %v961 = vunpack.c.0.s8 %v960
        %v962 = vlaneseq
        %v963 = vshrl.u32 %v962, 7
        %v964 = vsub.s32 %v961, %v963
        %v965 = vrot.slane %v958, %v964
        %v967 = vadd.f32 %v914, %v965
        %s968 = scalar_lea.vmem [#allocation3], 3
        %v969 = vld [vmem:[%s968] ss:$8 sm:$0x3]
        %v971 = vlaneseq
        %v972 = vshrl.u32 %v971, 7
        %v973 = vsub.s32 0, %v972
        %v974 = vrot.slane %v969, %v973
        %v975 = vlaneseq
        %v976 = vshrl.u32 %v975, 7
        %v977 = vsub.s32 1, %v976
        %v978 = vrot.slane %v969, %v977
        %981 = vrot.lane.b32.xlu0 %v974, 65
        %v982 = vpop.permute.xlu0 %981
        %983 = vrot.lane.b32.xlu0 %v978, 65
        %v984 = vpop.permute.xlu0 %983
        %v985 = vsel %vm318, %v982, %v984
        %v986 = vsel %vm318, %v984, %v982
        %s987 = scalar_lea.vmem [#allocation5], 48
        %v988 = vld [vmem:[%s987] ss:$8 sm:$0x3]
        %v990 = vlaneseq
        %v991 = vshrl.u32 %v990, 7
        %v992 = vsub.s32 0, %v991
        %v993 = vrot.slane %v988, %v992
        %v994 = vlaneseq
        %v995 = vshrl.u32 %v994, 7
        %v996 = vsub.s32 1, %v995
        %v997 = vrot.slane %v988, %v996
        %v1000 = vmul.f32 %v986, %v993
        %v1001 = vmul.f32 %v985, %v997
        %v1004 = vcombine.low %v1000, %v1001
        %v1006 = vunpack.c.l.s4 1966171168
        %v1007 = vunpack.c.0.s8 %v1006
        %v1008 = vlaneseq
        %v1009 = vshrl.u32 %v1008, 7
        %v1010 = vsub.s32 %v1007, %v1009
        %v1011 = vrot.slane %v1004, %v1010
        %v1013 = vunpack.c.l.s4 1966171168
        %v1014 = vunpack.c.0.s8 %v1013
        %v1015 = vlaneseq
        %v1016 = vshrl.u32 %v1015, 7
        %v1017 = vsub.s32 %v1014, %v1016
        %v1018 = vrot.slane %v1011, %v1017
        %v1020 = vadd.f32 %v967, %v1018
        %s1021 = scalar_lea.vmem [#allocation3], 4
        %v1022 = vld [vmem:[%s1021] ss:$8 sm:$0x3]
        %v1024 = vlaneseq
        %v1025 = vshrl.u32 %v1024, 7
        %v1026 = vsub.s32 0, %v1025
        %v1027 = vrot.slane %v1022, %v1026
        %v1028 = vlaneseq
        %v1029 = vshrl.u32 %v1028, 7
        %v1030 = vsub.s32 1, %v1029
        %v1031 = vrot.slane %v1022, %v1030
        %1034 = vrot.lane.b32.xlu0 %v1027, 64
        %v1035 = vpop.permute.xlu0 %1034
        %1036 = vrot.lane.b32.xlu0 %v1031, 64
        %v1037 = vpop.permute.xlu0 %1036
        %v1038 = vsel %vm331, %v1035, %v1037
        %v1039 = vsel %vm331, %v1037, %v1035
        %s1040 = scalar_lea.vmem [#allocation5], 64
        %v1041 = vld [vmem:[%s1040] ss:$8 sm:$0x3]
        %v1043 = vlaneseq
        %v1044 = vshrl.u32 %v1043, 7
        %v1045 = vsub.s32 0, %v1044
        %v1046 = vrot.slane %v1041, %v1045
        %v1047 = vlaneseq
        %v1048 = vshrl.u32 %v1047, 7
        %v1049 = vsub.s32 1, %v1048
        %v1050 = vrot.slane %v1041, %v1049
        %v1053 = vmul.f32 %v1039, %v1046
        %v1054 = vmul.f32 %v1038, %v1050
        %v1057 = vcombine.low %v1053, %v1054
        %v1059 = vunpack.c.l.s4 1966171168
        %v1060 = vunpack.c.0.s8 %v1059
        %v1061 = vlaneseq
        %v1062 = vshrl.u32 %v1061, 7
        %v1063 = vsub.s32 %v1060, %v1062
        %v1064 = vrot.slane %v1057, %v1063
        %v1066 = vunpack.c.l.s4 1966171168
        %v1067 = vunpack.c.0.s8 %v1066
        %v1068 = vlaneseq
        %v1069 = vshrl.u32 %v1068, 7
        %v1070 = vsub.s32 %v1067, %v1069
        %v1071 = vrot.slane %v1064, %v1070
        %v1073 = vadd.f32 %v1020, %v1071
        %s1074 = scalar_lea.vmem [#allocation3], 5
        %v1075 = vld [vmem:[%s1074] ss:$8 sm:$0x3]
        %v1077 = vlaneseq
        %v1078 = vshrl.u32 %v1077, 7
        %v1079 = vsub.s32 0, %v1078
        %v1080 = vrot.slane %v1075, %v1079
        %v1081 = vlaneseq
        %v1082 = vshrl.u32 %v1081, 7
        %v1083 = vsub.s32 1, %v1082
        %v1084 = vrot.slane %v1075, %v1083
        %1087 = vrot.lane.b32.xlu0 %v1080, 63
        %v1088 = vpop.permute.xlu0 %1087
        %1089 = vrot.lane.b32.xlu0 %v1084, 63
        %v1090 = vpop.permute.xlu0 %1089
        %v1091 = vsel %vm344, %v1088, %v1090
        %v1092 = vsel %vm344, %v1090, %v1088
        %s1093 = scalar_lea.vmem [#allocation5], 80
        %v1094 = vld [vmem:[%s1093] ss:$8 sm:$0x3]
        %v1096 = vlaneseq
        %v1097 = vshrl.u32 %v1096, 7
        %v1098 = vsub.s32 0, %v1097
        %v1099 = vrot.slane %v1094, %v1098
        %v1100 = vlaneseq
        %v1101 = vshrl.u32 %v1100, 7
        %v1102 = vsub.s32 1, %v1101
        %v1103 = vrot.slane %v1094, %v1102
        %v1106 = vmul.f32 %v1092, %v1099
        %v1107 = vmul.f32 %v1091, %v1103
        %v1110 = vcombine.low %v1106, %v1107
        %v1112 = vunpack.c.l.s4 1966171168
        %v1113 = vunpack.c.0.s8 %v1112
        %v1114 = vlaneseq
        %v1115 = vshrl.u32 %v1114, 7
        %v1116 = vsub.s32 %v1113, %v1115
        %v1117 = vrot.slane %v1110, %v1116
        %v1119 = vunpack.c.l.s4 1966171168
        %v1120 = vunpack.c.0.s8 %v1119
        %v1121 = vlaneseq
        %v1122 = vshrl.u32 %v1121, 7
        %v1123 = vsub.s32 %v1120, %v1122
        %v1124 = vrot.slane %v1117, %v1123
        %v1126 = vadd.f32 %v1073, %v1124
        %s1127 = scalar_lea.vmem [#allocation3], 6
        %v1128 = vld [vmem:[%s1127] ss:$8 sm:$0x3]
        %v1130 = vlaneseq
        %v1131 = vshrl.u32 %v1130, 7
        %v1132 = vsub.s32 0, %v1131
        %v1133 = vrot.slane %v1128, %v1132
        %v1134 = vlaneseq
        %v1135 = vshrl.u32 %v1134, 7
        %v1136 = vsub.s32 1, %v1135
        %v1137 = vrot.slane %v1128, %v1136
        %1140 = vrot.lane.b32.xlu0 %v1133, 57
        %v1141 = vpop.permute.xlu0 %1140
        %1142 = vrot.lane.b32.xlu0 %v1137, 57
        %v1143 = vpop.permute.xlu0 %1142
        %v1144 = vsel %vm357, %v1141, %v1143
        %v1145 = vsel %vm357, %v1143, %v1141
        %s1146 = scalar_lea.vmem [#allocation5], 96
        %v1147 = vld [vmem:[%s1146] ss:$8 sm:$0x3]
        %v1149 = vlaneseq
        %v1150 = vshrl.u32 %v1149, 7
        %v1151 = vsub.s32 0, %v1150
        %v1152 = vrot.slane %v1147, %v1151
        %v1153 = vlaneseq
        %v1154 = vshrl.u32 %v1153, 7
        %v1155 = vsub.s32 1, %v1154
        %v1156 = vrot.slane %v1147, %v1155
        %v1159 = vmul.f32 %v1145, %v1152
        %v1160 = vmul.f32 %v1144, %v1156
        %v1163 = vcombine.low %v1159, %v1160
        %v1165 = vunpack.c.l.s4 1966171168
        %v1166 = vunpack.c.0.s8 %v1165
        %v1167 = vlaneseq
        %v1168 = vshrl.u32 %v1167, 7
        %v1169 = vsub.s32 %v1166, %v1168
        %v1170 = vrot.slane %v1163, %v1169
        %v1172 = vunpack.c.l.s4 1966171168
        %v1173 = vunpack.c.0.s8 %v1172
        %v1174 = vlaneseq
        %v1175 = vshrl.u32 %v1174, 7
        %v1176 = vsub.s32 %v1173, %v1175
        %v1177 = vrot.slane %v1170, %v1176
        %v1179 = vadd.f32 %v1126, %v1177
        %s1180 = scalar_lea.vmem [#allocation3], 7
        %v1181 = vld [vmem:[%s1180] ss:$8 sm:$0x3]
        %v1183 = vlaneseq
        %v1184 = vshrl.u32 %v1183, 7
        %v1185 = vsub.s32 0, %v1184
        %v1186 = vrot.slane %v1181, %v1185
        %v1187 = vlaneseq
        %v1188 = vshrl.u32 %v1187, 7
        %v1189 = vsub.s32 1, %v1188
        %v1190 = vrot.slane %v1181, %v1189
        %1193 = vrot.lane.b32.xlu0 %v1186, 56
        %v1194 = vpop.permute.xlu0 %1193
        %1195 = vrot.lane.b32.xlu0 %v1190, 56
        %v1196 = vpop.permute.xlu0 %1195
        %v1197 = vsel %vm370, %v1194, %v1196
        %v1198 = vsel %vm370, %v1196, %v1194
        %s1199 = scalar_lea.vmem [#allocation5], 112
        %v1200 = vld [vmem:[%s1199] ss:$8 sm:$0x3]
        %v1202 = vlaneseq
        %v1203 = vshrl.u32 %v1202, 7
        %v1204 = vsub.s32 0, %v1203
        %v1205 = vrot.slane %v1200, %v1204
        %v1206 = vlaneseq
        %v1207 = vshrl.u32 %v1206, 7
        %v1208 = vsub.s32 1, %v1207
        %v1209 = vrot.slane %v1200, %v1208
        %v1212 = vmul.f32 %v1198, %v1205
        %v1213 = vmul.f32 %v1197, %v1209
        %v1216 = vcombine.low %v1212, %v1213
        %v1218 = vunpack.c.l.s4 1966171168
        %v1219 = vunpack.c.0.s8 %v1218
        %v1220 = vlaneseq
        %v1221 = vshrl.u32 %v1220, 7
        %v1222 = vsub.s32 %v1219, %v1221
        %v1223 = vrot.slane %v1216, %v1222
        %v1225 = vunpack.c.l.s4 1966171168
        %v1226 = vunpack.c.0.s8 %v1225
        %v1227 = vlaneseq
        %v1228 = vshrl.u32 %v1227, 7
        %v1229 = vsub.s32 %v1226, %v1228
        %v1230 = vrot.slane %v1223, %v1229
        %v1232 = vadd.f32 %v1179, %v1230
        %s1233 = scalar_lea.vmem [#allocation3], 16
        %v1234 = vld [vmem:[%s1233] ss:$8 sm:$0x3]
        %v1236 = vlaneseq
        %v1237 = vshrl.u32 %v1236, 7
        %v1238 = vsub.s32 0, %v1237
        %v1239 = vrot.slane %v1234, %v1238
        %v1240 = vlaneseq
        %v1241 = vshrl.u32 %v1240, 7
        %v1242 = vsub.s32 1, %v1241
        %v1243 = vrot.slane %v1234, %v1242
        %1246 = vrot.lane.b32.xlu0 %v1239, 55
        %v1247 = vpop.permute.xlu0 %1246
        %1248 = vrot.lane.b32.xlu0 %v1243, 55
        %v1249 = vpop.permute.xlu0 %1248
        %v1250 = vsel %vm383, %v1247, %v1249
        %v1251 = vsel %vm383, %v1249, %v1247
        %s1252 = scalar_lea.vmem [#allocation5], 128
        %v1253 = vld [vmem:[%s1252] ss:$8 sm:$0x3]
        %v1255 = vlaneseq
        %v1256 = vshrl.u32 %v1255, 7
        %v1257 = vsub.s32 0, %v1256
        %v1258 = vrot.slane %v1253, %v1257
        %v1259 = vlaneseq
        %v1260 = vshrl.u32 %v1259, 7
        %v1261 = vsub.s32 1, %v1260
        %v1262 = vrot.slane %v1253, %v1261
        %v1265 = vmul.f32 %v1251, %v1258
        %v1266 = vmul.f32 %v1250, %v1262
        %v1269 = vcombine.low %v1265, %v1266
        %v1271 = vunpack.c.l.s4 1966171168
        %v1272 = vunpack.c.0.s8 %v1271
        %v1273 = vlaneseq
        %v1274 = vshrl.u32 %v1273, 7
        %v1275 = vsub.s32 %v1272, %v1274
        %v1276 = vrot.slane %v1269, %v1275
        %v1278 = vunpack.c.l.s4 1966171168
        %v1279 = vunpack.c.0.s8 %v1278
        %v1280 = vlaneseq
        %v1281 = vshrl.u32 %v1280, 7
        %v1282 = vsub.s32 %v1279, %v1281
        %v1283 = vrot.slane %v1276, %v1282
        %v1285 = vadd.f32 %v1232, %v1283
        %s1286 = scalar_lea.vmem [#allocation3], 17
        %v1287 = vld [vmem:[%s1286] ss:$8 sm:$0x3]
        %v1289 = vlaneseq
        %v1290 = vshrl.u32 %v1289, 7
        %v1291 = vsub.s32 0, %v1290
        %v1292 = vrot.slane %v1287, %v1291
        %v1293 = vlaneseq
        %v1294 = vshrl.u32 %v1293, 7
        %v1295 = vsub.s32 1, %v1294
        %v1296 = vrot.slane %v1287, %v1295
        %1299 = vrot.lane.b32.xlu0 %v1292, 9
        %v1300 = vpop.permute.xlu0 %1299
        %1301 = vrot.lane.b32.xlu0 %v1296, 9
        %v1302 = vpop.permute.xlu0 %1301
        %v1303 = vsel %vm396, %v1300, %v1302
        %v1304 = vsel %vm396, %v1302, %v1300
        %s1305 = scalar_lea.vmem [#allocation5], 144
        %v1306 = vld [vmem:[%s1305] ss:$8 sm:$0x3]
        %v1308 = vlaneseq
        %v1309 = vshrl.u32 %v1308, 7
        %v1310 = vsub.s32 0, %v1309
        %v1311 = vrot.slane %v1306, %v1310
        %v1312 = vlaneseq
        %v1313 = vshrl.u32 %v1312, 7
        %v1314 = vsub.s32 1, %v1313
        %v1315 = vrot.slane %v1306, %v1314
        %v1318 = vmul.f32 %v1304, %v1311
        %v1319 = vmul.f32 %v1303, %v1315
        %v1322 = vcombine.low %v1318, %v1319
        %v1324 = vunpack.c.l.s4 1966171168
        %v1325 = vunpack.c.0.s8 %v1324
        %v1326 = vlaneseq
        %v1327 = vshrl.u32 %v1326, 7
        %v1328 = vsub.s32 %v1325, %v1327
        %v1329 = vrot.slane %v1322, %v1328
        %v1331 = vunpack.c.l.s4 1966171168
        %v1332 = vunpack.c.0.s8 %v1331
        %v1333 = vlaneseq
        %v1334 = vshrl.u32 %v1333, 7
        %v1335 = vsub.s32 %v1332, %v1334
        %v1336 = vrot.slane %v1329, %v1335
        %v1338 = vadd.f32 %v1285, %v1336
        %s1339 = scalar_lea.vmem [#allocation3], 18
        %v1340 = vld [vmem:[%s1339] ss:$8 sm:$0x3]
        %v1342 = vlaneseq
        %v1343 = vshrl.u32 %v1342, 7
        %v1344 = vsub.s32 0, %v1343
        %v1345 = vrot.slane %v1340, %v1344
        %v1346 = vlaneseq
        %v1347 = vshrl.u32 %v1346, 7
        %v1348 = vsub.s32 1, %v1347
        %v1349 = vrot.slane %v1340, %v1348
        %1352 = vrot.lane.b32.xlu0 %v1345, 8
        %v1353 = vpop.permute.xlu0 %1352
        %1354 = vrot.lane.b32.xlu0 %v1349, 8
        %v1355 = vpop.permute.xlu0 %1354
        %v1356 = vsel %vm409, %v1353, %v1355
        %v1357 = vsel %vm409, %v1355, %v1353
        %s1358 = scalar_lea.vmem [#allocation5], 160
        %v1359 = vld [vmem:[%s1358] ss:$8 sm:$0x3]
        %v1361 = vlaneseq
        %v1362 = vshrl.u32 %v1361, 7
        %v1363 = vsub.s32 0, %v1362
        %v1364 = vrot.slane %v1359, %v1363
        %v1365 = vlaneseq
        %v1366 = vshrl.u32 %v1365, 7
        %v1367 = vsub.s32 1, %v1366
        %v1368 = vrot.slane %v1359, %v1367
        %v1371 = vmul.f32 %v1357, %v1364
        %v1372 = vmul.f32 %v1356, %v1368
        %v1375 = vcombine.low %v1371, %v1372
        %v1377 = vunpack.c.l.s4 1966171168
        %v1378 = vunpack.c.0.s8 %v1377
        %v1379 = vlaneseq
        %v1380 = vshrl.u32 %v1379, 7
        %v1381 = vsub.s32 %v1378, %v1380
        %v1382 = vrot.slane %v1375, %v1381
        %v1384 = vunpack.c.l.s4 1966171168
        %v1385 = vunpack.c.0.s8 %v1384
        %v1386 = vlaneseq
        %v1387 = vshrl.u32 %v1386, 7
        %v1388 = vsub.s32 %v1385, %v1387
        %v1389 = vrot.slane %v1382, %v1388
        %v1391 = vadd.f32 %v1338, %v1389
        %s1392 = scalar_lea.vmem [#allocation3], 19
        %v1393 = vld [vmem:[%s1392] ss:$8 sm:$0x3]
        %v1395 = vlaneseq
        %v1396 = vshrl.u32 %v1395, 7
        %v1397 = vsub.s32 0, %v1396
        %v1398 = vrot.slane %v1393, %v1397
        %v1399 = vlaneseq
        %v1400 = vshrl.u32 %v1399, 7
        %v1401 = vsub.s32 1, %v1400
        %v1402 = vrot.slane %v1393, %v1401
        %1405 = vrot.lane.b32.xlu0 %v1398, 7
        %v1406 = vpop.permute.xlu0 %1405
        %1407 = vrot.lane.b32.xlu0 %v1402, 7
        %v1408 = vpop.permute.xlu0 %1407
        %v1409 = vsel %vm422, %v1406, %v1408
        %v1410 = vsel %vm422, %v1408, %v1406
        %s1411 = scalar_lea.vmem [#allocation5], 176
        %v1412 = vld [vmem:[%s1411] ss:$8 sm:$0x3]
        %v1414 = vlaneseq
        %v1415 = vshrl.u32 %v1414, 7
        %v1416 = vsub.s32 0, %v1415
        %v1417 = vrot.slane %v1412, %v1416
        %v1418 = vlaneseq
        %v1419 = vshrl.u32 %v1418, 7
        %v1420 = vsub.s32 1, %v1419
        %v1421 = vrot.slane %v1412, %v1420
        %v1424 = vmul.f32 %v1410, %v1417
        %v1425 = vmul.f32 %v1409, %v1421
        %v1428 = vcombine.low %v1424, %v1425
        %v1430 = vunpack.c.l.s4 1966171168
        %v1431 = vunpack.c.0.s8 %v1430
        %v1432 = vlaneseq
        %v1433 = vshrl.u32 %v1432, 7
        %v1434 = vsub.s32 %v1431, %v1433
        %v1435 = vrot.slane %v1428, %v1434
        %v1437 = vunpack.c.l.s4 1966171168
        %v1438 = vunpack.c.0.s8 %v1437
        %v1439 = vlaneseq
        %v1440 = vshrl.u32 %v1439, 7
        %v1441 = vsub.s32 %v1438, %v1440
        %v1442 = vrot.slane %v1435, %v1441
        %v1444 = vadd.f32 %v1391, %v1442
        %s1445 = scalar_lea.vmem [#allocation3], 20
        %v1446 = vld [vmem:[%s1445] ss:$8 sm:$0x3]
        %v1448 = vlaneseq
        %v1449 = vshrl.u32 %v1448, 7
        %v1450 = vsub.s32 0, %v1449
        %v1451 = vrot.slane %v1446, %v1450
        %v1452 = vlaneseq
        %v1453 = vshrl.u32 %v1452, 7
        %v1454 = vsub.s32 1, %v1453
        %v1455 = vrot.slane %v1446, %v1454
        %1458 = vrot.lane.b32.xlu0 %v1451, 1
        %v1459 = vpop.permute.xlu0 %1458
        %1460 = vrot.lane.b32.xlu0 %v1455, 1
        %v1461 = vpop.permute.xlu0 %1460
        %v1462 = vsel %vm435, %v1459, %v1461
        %v1463 = vsel %vm435, %v1461, %v1459
        %s1464 = scalar_lea.vmem [#allocation5], 192
        %v1465 = vld [vmem:[%s1464] ss:$8 sm:$0x3]
        %v1467 = vlaneseq
        %v1468 = vshrl.u32 %v1467, 7
        %v1469 = vsub.s32 0, %v1468
        %v1470 = vrot.slane %v1465, %v1469
        %v1471 = vlaneseq
        %v1472 = vshrl.u32 %v1471, 7
        %v1473 = vsub.s32 1, %v1472
        %v1474 = vrot.slane %v1465, %v1473
        %v1477 = vmul.f32 %v1463, %v1470
        %v1478 = vmul.f32 %v1462, %v1474
        %v1481 = vcombine.low %v1477, %v1478
        %v1483 = vunpack.c.l.s4 1966171168
        %v1484 = vunpack.c.0.s8 %v1483
        %v1485 = vlaneseq
        %v1486 = vshrl.u32 %v1485, 7
        %v1487 = vsub.s32 %v1484, %v1486
        %v1488 = vrot.slane %v1481, %v1487
        %v1490 = vunpack.c.l.s4 1966171168
        %v1491 = vunpack.c.0.s8 %v1490
        %v1492 = vlaneseq
        %v1493 = vshrl.u32 %v1492, 7
        %v1494 = vsub.s32 %v1491, %v1493
        %v1495 = vrot.slane %v1488, %v1494
        %v1497 = vadd.f32 %v1444, %v1495
        %s1498 = scalar_lea.vmem [#allocation3], 22
        %v1499 = vld [vmem:[%s1498] ss:$8 sm:$0x3]
        %v1501 = vlaneseq
        %v1502 = vshrl.u32 %v1501, 7
        %v1503 = vsub.s32 0, %v1502
        %v1504 = vrot.slane %v1499, %v1503
        %v1505 = vlaneseq
        %v1506 = vshrl.u32 %v1505, 7
        %v1507 = vsub.s32 1, %v1506
        %v1508 = vrot.slane %v1499, %v1507
        %1511 = vrot.lane.b32.xlu0 %v1504, 127
        %v1512 = vpop.permute.xlu0 %1511
        %1513 = vrot.lane.b32.xlu0 %v1508, 127
        %v1514 = vpop.permute.xlu0 %1513
        %v1515 = vsel %vm450, %v1512, %v1514
        %v1516 = vsel %vm450, %v1514, %v1512
        %s1517 = scalar_lea.vmem [#allocation5], 224
        %v1518 = vld [vmem:[%s1517] ss:$8 sm:$0x3]
        %v1520 = vlaneseq
        %v1521 = vshrl.u32 %v1520, 7
        %v1522 = vsub.s32 0, %v1521
        %v1523 = vrot.slane %v1518, %v1522
        %v1524 = vlaneseq
        %v1525 = vshrl.u32 %v1524, 7
        %v1526 = vsub.s32 1, %v1525
        %v1527 = vrot.slane %v1518, %v1526
        %v1530 = vmul.f32 %v1515, %v1523
        %v1531 = vmul.f32 %v1516, %v1527
        %v1534 = vcombine.low %v1530, %v1531
        %v1536 = vunpack.c.l.s4 1966171168
        %v1537 = vunpack.c.0.s8 %v1536
        %v1538 = vlaneseq
        %v1539 = vshrl.u32 %v1538, 7
        %v1540 = vsub.s32 %v1537, %v1539
        %v1541 = vrot.slane %v1534, %v1540
        %v1543 = vunpack.c.l.s4 1966171168
        %v1544 = vunpack.c.0.s8 %v1543
        %v1545 = vlaneseq
        %v1546 = vshrl.u32 %v1545, 7
        %v1547 = vsub.s32 %v1544, %v1546
        %v1548 = vrot.slane %v1541, %v1547
        %v1550 = vadd.f32 %v1497, %v1548
        %s1551 = scalar_lea.vmem [#allocation3], 23
        %v1552 = vld [vmem:[%s1551] ss:$8 sm:$0x3]
        %v1554 = vlaneseq
        %v1555 = vshrl.u32 %v1554, 7
        %v1556 = vsub.s32 0, %v1555
        %v1557 = vrot.slane %v1552, %v1556
        %v1558 = vlaneseq
        %v1559 = vshrl.u32 %v1558, 7
        %v1560 = vsub.s32 1, %v1559
        %v1561 = vrot.slane %v1552, %v1560
        %1564 = vrot.lane.b32.xlu0 %v1557, 121
        %v1565 = vpop.permute.xlu0 %1564
        %1566 = vrot.lane.b32.xlu0 %v1561, 121
        %v1567 = vpop.permute.xlu0 %1566
        %v1568 = vsel %vm463, %v1565, %v1567
        %v1569 = vsel %vm463, %v1567, %v1565
        %s1570 = scalar_lea.vmem [#allocation5], 240
        %v1571 = vld [vmem:[%s1570] ss:$8 sm:$0x3]
        %v1573 = vlaneseq
        %v1574 = vshrl.u32 %v1573, 7
        %v1575 = vsub.s32 0, %v1574
        %v1576 = vrot.slane %v1571, %v1575
        %v1577 = vlaneseq
        %v1578 = vshrl.u32 %v1577, 7
        %v1579 = vsub.s32 1, %v1578
        %v1580 = vrot.slane %v1571, %v1579
        %v1583 = vmul.f32 %v1568, %v1576
        %v1584 = vmul.f32 %v1569, %v1580
        %v1587 = vcombine.low %v1583, %v1584
        %v1589 = vunpack.c.l.s4 1966171168
        %v1590 = vunpack.c.0.s8 %v1589
        %v1591 = vlaneseq
        %v1592 = vshrl.u32 %v1591, 7
        %v1593 = vsub.s32 %v1590, %v1592
        %v1594 = vrot.slane %v1587, %v1593
        %v1596 = vunpack.c.l.s4 1966171168
        %v1597 = vunpack.c.0.s8 %v1596
        %v1598 = vlaneseq
        %v1599 = vshrl.u32 %v1598, 7
        %v1600 = vsub.s32 %v1597, %v1599
        %v1601 = vrot.slane %v1594, %v1600
        %v1603 = vadd.f32 %v1550, %v1601
        %s1604 = scalar_lea.vmem [#allocation3], 32
        %v1605 = vld [vmem:[%s1604] ss:$8 sm:$0x3]
        %v1607 = vlaneseq
        %v1608 = vshrl.u32 %v1607, 7
        %v1609 = vsub.s32 0, %v1608
        %v1610 = vrot.slane %v1605, %v1609
        %v1611 = vlaneseq
        %v1612 = vshrl.u32 %v1611, 7
        %v1613 = vsub.s32 1, %v1612
        %v1614 = vrot.slane %v1605, %v1613
        %1617 = vrot.lane.b32.xlu0 %v1610, 120
        %v1618 = vpop.permute.xlu0 %1617
        %1619 = vrot.lane.b32.xlu0 %v1614, 120
        %v1620 = vpop.permute.xlu0 %1619
        %v1621 = vsel %vm476, %v1618, %v1620
        %v1622 = vsel %vm476, %v1620, %v1618
        %s1623 = scalar_lea.vmem [#allocation5], 256
        %v1624 = vld [vmem:[%s1623] ss:$8 sm:$0x3]
        %v1626 = vlaneseq
        %v1627 = vshrl.u32 %v1626, 7
        %v1628 = vsub.s32 0, %v1627
        %v1629 = vrot.slane %v1624, %v1628
        %v1630 = vlaneseq
        %v1631 = vshrl.u32 %v1630, 7
        %v1632 = vsub.s32 1, %v1631
        %v1633 = vrot.slane %v1624, %v1632
        %v1636 = vmul.f32 %v1621, %v1629
        %v1637 = vmul.f32 %v1622, %v1633
        %v1640 = vcombine.low %v1636, %v1637
        %v1642 = vunpack.c.l.s4 1966171168
        %v1643 = vunpack.c.0.s8 %v1642
        %v1644 = vlaneseq
        %v1645 = vshrl.u32 %v1644, 7
        %v1646 = vsub.s32 %v1643, %v1645
        %v1647 = vrot.slane %v1640, %v1646
        %v1649 = vunpack.c.l.s4 1966171168
        %v1650 = vunpack.c.0.s8 %v1649
        %v1651 = vlaneseq
        %v1652 = vshrl.u32 %v1651, 7
        %v1653 = vsub.s32 %v1650, %v1652
        %v1654 = vrot.slane %v1647, %v1653
        %v1656 = vadd.f32 %v1603, %v1654
        %s1657 = scalar_lea.vmem [#allocation3], 33
        %v1658 = vld [vmem:[%s1657] ss:$8 sm:$0x3]
        %v1660 = vlaneseq
        %v1661 = vshrl.u32 %v1660, 7
        %v1662 = vsub.s32 0, %v1661
        %v1663 = vrot.slane %v1658, %v1662
        %v1664 = vlaneseq
        %v1665 = vshrl.u32 %v1664, 7
        %v1666 = vsub.s32 1, %v1665
        %v1667 = vrot.slane %v1658, %v1666
        %1670 = vrot.lane.b32.xlu0 %v1663, 119
        %v1671 = vpop.permute.xlu0 %1670
        %1672 = vrot.lane.b32.xlu0 %v1667, 119
        %v1673 = vpop.permute.xlu0 %1672
        %v1674 = vsel %vm489, %v1671, %v1673
        %v1675 = vsel %vm489, %v1673, %v1671
        %s1676 = scalar_lea.vmem [#allocation5], 272
        %v1677 = vld [vmem:[%s1676] ss:$8 sm:$0x3]
        %v1679 = vlaneseq
        %v1680 = vshrl.u32 %v1679, 7
        %v1681 = vsub.s32 0, %v1680
        %v1682 = vrot.slane %v1677, %v1681
        %v1683 = vlaneseq
        %v1684 = vshrl.u32 %v1683, 7
        %v1685 = vsub.s32 1, %v1684
        %v1686 = vrot.slane %v1677, %v1685
        %v1689 = vmul.f32 %v1674, %v1682
        %v1690 = vmul.f32 %v1675, %v1686
        %v1693 = vcombine.low %v1689, %v1690
        %v1695 = vunpack.c.l.s4 1966171168
        %v1696 = vunpack.c.0.s8 %v1695
        %v1697 = vlaneseq
        %v1698 = vshrl.u32 %v1697, 7
        %v1699 = vsub.s32 %v1696, %v1698
        %v1700 = vrot.slane %v1693, %v1699
        %v1702 = vunpack.c.l.s4 1966171168
        %v1703 = vunpack.c.0.s8 %v1702
        %v1704 = vlaneseq
        %v1705 = vshrl.u32 %v1704, 7
        %v1706 = vsub.s32 %v1703, %v1705
        %v1707 = vrot.slane %v1700, %v1706
        %v1709 = vadd.f32 %v1656, %v1707
        %s1710 = scalar_lea.vmem [#allocation3], 34
        %v1711 = vld [vmem:[%s1710] ss:$8 sm:$0x3]
        %v1713 = vlaneseq
        %v1714 = vshrl.u32 %v1713, 7
        %v1715 = vsub.s32 0, %v1714
        %v1716 = vrot.slane %v1711, %v1715
        %v1717 = vlaneseq
        %v1718 = vshrl.u32 %v1717, 7
        %v1719 = vsub.s32 1, %v1718
        %v1720 = vrot.slane %v1711, %v1719
        %1723 = vrot.lane.b32.xlu0 %v1716, 73
        %v1724 = vpop.permute.xlu0 %1723
        %1725 = vrot.lane.b32.xlu0 %v1720, 73
        %v1726 = vpop.permute.xlu0 %1725
        %v1727 = vsel %vm279, %v1724, %v1726
        %v1728 = vsel %vm279, %v1726, %v1724
        %s1729 = scalar_lea.vmem [#allocation5], 288
        %v1730 = vld [vmem:[%s1729] ss:$8 sm:$0x3]
        %v1732 = vlaneseq
        %v1733 = vshrl.u32 %v1732, 7
        %v1734 = vsub.s32 0, %v1733
        %v1735 = vrot.slane %v1730, %v1734
        %v1736 = vlaneseq
        %v1737 = vshrl.u32 %v1736, 7
        %v1738 = vsub.s32 1, %v1737
        %v1739 = vrot.slane %v1730, %v1738
        %v1742 = vmul.f32 %v1727, %v1735
        %v1743 = vmul.f32 %v1728, %v1739
        %v1746 = vcombine.low %v1742, %v1743
        %v1748 = vunpack.c.l.s4 1966171168
        %v1749 = vunpack.c.0.s8 %v1748
        %v1750 = vlaneseq
        %v1751 = vshrl.u32 %v1750, 7
        %v1752 = vsub.s32 %v1749, %v1751
        %v1753 = vrot.slane %v1746, %v1752
        %v1755 = vunpack.c.l.s4 1966171168
        %v1756 = vunpack.c.0.s8 %v1755
        %v1757 = vlaneseq
        %v1758 = vshrl.u32 %v1757, 7
        %v1759 = vsub.s32 %v1756, %v1758
        %v1760 = vrot.slane %v1753, %v1759
        %v1762 = vadd.f32 %v1709, %v1760
        %s1763 = scalar_lea.vmem [#allocation3], 35
        %v1764 = vld [vmem:[%s1763] ss:$8 sm:$0x3]
        %v1766 = vlaneseq
        %v1767 = vshrl.u32 %v1766, 7
        %v1768 = vsub.s32 0, %v1767
        %v1769 = vrot.slane %v1764, %v1768
        %v1770 = vlaneseq
        %v1771 = vshrl.u32 %v1770, 7
        %v1772 = vsub.s32 1, %v1771
        %v1773 = vrot.slane %v1764, %v1772
        %1776 = vrot.lane.b32.xlu0 %v1769, 72
        %v1777 = vpop.permute.xlu0 %1776
        %1778 = vrot.lane.b32.xlu0 %v1773, 72
        %v1779 = vpop.permute.xlu0 %1778
        %v1780 = vsel %vm292, %v1777, %v1779
        %v1781 = vsel %vm292, %v1779, %v1777
        %s1782 = scalar_lea.vmem [#allocation5], 304
        %v1783 = vld [vmem:[%s1782] ss:$8 sm:$0x3]
        %v1785 = vlaneseq
        %v1786 = vshrl.u32 %v1785, 7
        %v1787 = vsub.s32 0, %v1786
        %v1788 = vrot.slane %v1783, %v1787
        %v1789 = vlaneseq
        %v1790 = vshrl.u32 %v1789, 7
        %v1791 = vsub.s32 1, %v1790
        %v1792 = vrot.slane %v1783, %v1791
        %v1795 = vmul.f32 %v1780, %v1788
        %v1796 = vmul.f32 %v1781, %v1792
        %v1799 = vcombine.low %v1795, %v1796
        %v1801 = vunpack.c.l.s4 1966171168
        %v1802 = vunpack.c.0.s8 %v1801
        %v1803 = vlaneseq
        %v1804 = vshrl.u32 %v1803, 7
        %v1805 = vsub.s32 %v1802, %v1804
        %v1806 = vrot.slane %v1799, %v1805
        %v1808 = vunpack.c.l.s4 1966171168
        %v1809 = vunpack.c.0.s8 %v1808
        %v1810 = vlaneseq
        %v1811 = vshrl.u32 %v1810, 7
        %v1812 = vsub.s32 %v1809, %v1811
        %v1813 = vrot.slane %v1806, %v1812
        %v1815 = vadd.f32 %v1762, %v1813
        %s1816 = scalar_lea.vmem [#allocation3], 36
        %v1817 = vld [vmem:[%s1816] ss:$8 sm:$0x3]
        %v1819 = vlaneseq
        %v1820 = vshrl.u32 %v1819, 7
        %v1821 = vsub.s32 0, %v1820
        %v1822 = vrot.slane %v1817, %v1821
        %v1823 = vlaneseq
        %v1824 = vshrl.u32 %v1823, 7
        %v1825 = vsub.s32 1, %v1824
        %v1826 = vrot.slane %v1817, %v1825
        %1829 = vrot.lane.b32.xlu0 %v1822, 71
        %v1830 = vpop.permute.xlu0 %1829
        %1831 = vrot.lane.b32.xlu0 %v1826, 71
        %v1832 = vpop.permute.xlu0 %1831
        %v1833 = vsel %vm305, %v1830, %v1832
        %v1834 = vsel %vm305, %v1832, %v1830
        %s1835 = scalar_lea.vmem [#allocation5], 320
        %v1836 = vld [vmem:[%s1835] ss:$8 sm:$0x3]
        %v1838 = vlaneseq
        %v1839 = vshrl.u32 %v1838, 7
        %v1840 = vsub.s32 0, %v1839
        %v1841 = vrot.slane %v1836, %v1840
        %v1842 = vlaneseq
        %v1843 = vshrl.u32 %v1842, 7
        %v1844 = vsub.s32 1, %v1843
        %v1845 = vrot.slane %v1836, %v1844
        %v1848 = vmul.f32 %v1833, %v1841
        %v1849 = vmul.f32 %v1834, %v1845
        %v1852 = vcombine.low %v1848, %v1849
        %v1854 = vunpack.c.l.s4 1966171168
        %v1855 = vunpack.c.0.s8 %v1854
        %v1856 = vlaneseq
        %v1857 = vshrl.u32 %v1856, 7
        %v1858 = vsub.s32 %v1855, %v1857
        %v1859 = vrot.slane %v1852, %v1858
        %v1861 = vunpack.c.l.s4 1966171168
        %v1862 = vunpack.c.0.s8 %v1861
        %v1863 = vlaneseq
        %v1864 = vshrl.u32 %v1863, 7
        %v1865 = vsub.s32 %v1862, %v1864
        %v1866 = vrot.slane %v1859, %v1865
        %v1868 = vadd.f32 %v1815, %v1866
        %s1869 = scalar_lea.vmem [#allocation3], 37
        %v1870 = vld [vmem:[%s1869] ss:$8 sm:$0x3]
        %v1872 = vlaneseq
        %v1873 = vshrl.u32 %v1872, 7
        %v1874 = vsub.s32 0, %v1873
        %v1875 = vrot.slane %v1870, %v1874
        %v1876 = vlaneseq
        %v1877 = vshrl.u32 %v1876, 7
        %v1878 = vsub.s32 1, %v1877
        %v1879 = vrot.slane %v1870, %v1878
        %1882 = vrot.lane.b32.xlu0 %v1875, 65
        %v1883 = vpop.permute.xlu0 %1882
        %1884 = vrot.lane.b32.xlu0 %v1879, 65
        %v1885 = vpop.permute.xlu0 %1884
        %v1886 = vsel %vm318, %v1883, %v1885
        %v1887 = vsel %vm318, %v1885, %v1883
        %s1888 = scalar_lea.vmem [#allocation5], 336
        %v1889 = vld [vmem:[%s1888] ss:$8 sm:$0x3]
        %v1891 = vlaneseq
        %v1892 = vshrl.u32 %v1891, 7
        %v1893 = vsub.s32 0, %v1892
        %v1894 = vrot.slane %v1889, %v1893
        %v1895 = vlaneseq
        %v1896 = vshrl.u32 %v1895, 7
        %v1897 = vsub.s32 1, %v1896
        %v1898 = vrot.slane %v1889, %v1897
        %v1901 = vmul.f32 %v1886, %v1894
        %v1902 = vmul.f32 %v1887, %v1898
        %v1905 = vcombine.low %v1901, %v1902
        %v1907 = vunpack.c.l.s4 1966171168
        %v1908 = vunpack.c.0.s8 %v1907
        %v1909 = vlaneseq
        %v1910 = vshrl.u32 %v1909, 7
        %v1911 = vsub.s32 %v1908, %v1910
        %v1912 = vrot.slane %v1905, %v1911
        %v1914 = vunpack.c.l.s4 1966171168
        %v1915 = vunpack.c.0.s8 %v1914
        %v1916 = vlaneseq
        %v1917 = vshrl.u32 %v1916, 7
        %v1918 = vsub.s32 %v1915, %v1917
        %v1919 = vrot.slane %v1912, %v1918
        %v1921 = vadd.f32 %v1868, %v1919
        %s1922 = scalar_lea.vmem [#allocation3], 38
        %v1923 = vld [vmem:[%s1922] ss:$8 sm:$0x3]
        %v1925 = vlaneseq
        %v1926 = vshrl.u32 %v1925, 7
        %v1927 = vsub.s32 0, %v1926
        %v1928 = vrot.slane %v1923, %v1927
        %v1929 = vlaneseq
        %v1930 = vshrl.u32 %v1929, 7
        %v1931 = vsub.s32 1, %v1930
        %v1932 = vrot.slane %v1923, %v1931
        %1935 = vrot.lane.b32.xlu0 %v1928, 64
        %v1936 = vpop.permute.xlu0 %1935
        %1937 = vrot.lane.b32.xlu0 %v1932, 64
        %v1938 = vpop.permute.xlu0 %1937
        %v1939 = vsel %vm331, %v1936, %v1938
        %v1940 = vsel %vm331, %v1938, %v1936
        %s1941 = scalar_lea.vmem [#allocation5], 352
        %v1942 = vld [vmem:[%s1941] ss:$8 sm:$0x3]
        %v1944 = vlaneseq
        %v1945 = vshrl.u32 %v1944, 7
        %v1946 = vsub.s32 0, %v1945
        %v1947 = vrot.slane %v1942, %v1946
        %v1948 = vlaneseq
        %v1949 = vshrl.u32 %v1948, 7
        %v1950 = vsub.s32 1, %v1949
        %v1951 = vrot.slane %v1942, %v1950
        %v1954 = vmul.f32 %v1939, %v1947
        %v1955 = vmul.f32 %v1940, %v1951
        %v1958 = vcombine.low %v1954, %v1955
        %v1960 = vunpack.c.l.s4 1966171168
        %v1961 = vunpack.c.0.s8 %v1960
        %v1962 = vlaneseq
        %v1963 = vshrl.u32 %v1962, 7
        %v1964 = vsub.s32 %v1961, %v1963
        %v1965 = vrot.slane %v1958, %v1964
        %v1967 = vunpack.c.l.s4 1966171168
        %v1968 = vunpack.c.0.s8 %v1967
        %v1969 = vlaneseq
        %v1970 = vshrl.u32 %v1969, 7
        %v1971 = vsub.s32 %v1968, %v1970
        %v1972 = vrot.slane %v1965, %v1971
        %v1974 = vadd.f32 %v1921, %v1972
        %s1975 = scalar_lea.vmem [#allocation3], 39
        %v1976 = vld [vmem:[%s1975] ss:$8 sm:$0x3]
        %v1978 = vlaneseq
        %v1979 = vshrl.u32 %v1978, 7
        %v1980 = vsub.s32 0, %v1979
        %v1981 = vrot.slane %v1976, %v1980
        %v1982 = vlaneseq
        %v1983 = vshrl.u32 %v1982, 7
        %v1984 = vsub.s32 1, %v1983
        %v1985 = vrot.slane %v1976, %v1984
        %1988 = vrot.lane.b32.xlu0 %v1981, 63
        %v1989 = vpop.permute.xlu0 %1988
        %1990 = vrot.lane.b32.xlu0 %v1985, 63
        %v1991 = vpop.permute.xlu0 %1990
        %v1992 = vsel %vm344, %v1989, %v1991
        %v1993 = vsel %vm344, %v1991, %v1989
        %s1994 = scalar_lea.vmem [#allocation5], 368
        %v1995 = vld [vmem:[%s1994] ss:$8 sm:$0x3]
        %v1997 = vlaneseq
        %v1998 = vshrl.u32 %v1997, 7
        %v1999 = vsub.s32 0, %v1998
        %v2000 = vrot.slane %v1995, %v1999
        %v2001 = vlaneseq
        %v2002 = vshrl.u32 %v2001, 7
        %v2003 = vsub.s32 1, %v2002
        %v2004 = vrot.slane %v1995, %v2003
        %v2007 = vmul.f32 %v1992, %v2000
        %v2008 = vmul.f32 %v1993, %v2004
        %v2011 = vcombine.low %v2007, %v2008
        %v2013 = vunpack.c.l.s4 1966171168
        %v2014 = vunpack.c.0.s8 %v2013
        %v2015 = vlaneseq
        %v2016 = vshrl.u32 %v2015, 7
        %v2017 = vsub.s32 %v2014, %v2016
        %v2018 = vrot.slane %v2011, %v2017
        %v2020 = vunpack.c.l.s4 1966171168
        %v2021 = vunpack.c.0.s8 %v2020
        %v2022 = vlaneseq
        %v2023 = vshrl.u32 %v2022, 7
        %v2024 = vsub.s32 %v2021, %v2023
        %v2025 = vrot.slane %v2018, %v2024
        %v2027 = vadd.f32 %v1974, %v2025
        %s2028 = scalar_lea.vmem [#allocation3], 48
        %v2029 = vld [vmem:[%s2028] ss:$8 sm:$0x3]
        %v2031 = vlaneseq
        %v2032 = vshrl.u32 %v2031, 7
        %v2033 = vsub.s32 0, %v2032
        %v2034 = vrot.slane %v2029, %v2033
        %v2035 = vlaneseq
        %v2036 = vshrl.u32 %v2035, 7
        %v2037 = vsub.s32 1, %v2036
        %v2038 = vrot.slane %v2029, %v2037
        %2041 = vrot.lane.b32.xlu0 %v2034, 57
        %v2042 = vpop.permute.xlu0 %2041
        %2043 = vrot.lane.b32.xlu0 %v2038, 57
        %v2044 = vpop.permute.xlu0 %2043
        %v2045 = vsel %vm357, %v2042, %v2044
        %v2046 = vsel %vm357, %v2044, %v2042
        %s2047 = scalar_lea.vmem [#allocation5], 384
        %v2048 = vld [vmem:[%s2047] ss:$8 sm:$0x3]
        %v2050 = vlaneseq
        %v2051 = vshrl.u32 %v2050, 7
        %v2052 = vsub.s32 0, %v2051
        %v2053 = vrot.slane %v2048, %v2052
        %v2054 = vlaneseq
        %v2055 = vshrl.u32 %v2054, 7
        %v2056 = vsub.s32 1, %v2055
        %v2057 = vrot.slane %v2048, %v2056
        %v2060 = vmul.f32 %v2045, %v2053
        %v2061 = vmul.f32 %v2046, %v2057
        %v2064 = vcombine.low %v2060, %v2061
        %v2066 = vunpack.c.l.s4 1966171168
        %v2067 = vunpack.c.0.s8 %v2066
        %v2068 = vlaneseq
        %v2069 = vshrl.u32 %v2068, 7
        %v2070 = vsub.s32 %v2067, %v2069
        %v2071 = vrot.slane %v2064, %v2070
        %v2073 = vunpack.c.l.s4 1966171168
        %v2074 = vunpack.c.0.s8 %v2073
        %v2075 = vlaneseq
        %v2076 = vshrl.u32 %v2075, 7
        %v2077 = vsub.s32 %v2074, %v2076
        %v2078 = vrot.slane %v2071, %v2077
        %v2080 = vadd.f32 %v2027, %v2078
        %s2081 = scalar_lea.vmem [#allocation3], 49
        %v2082 = vld [vmem:[%s2081] ss:$8 sm:$0x3]
        %v2084 = vlaneseq
        %v2085 = vshrl.u32 %v2084, 7
        %v2086 = vsub.s32 0, %v2085
        %v2087 = vrot.slane %v2082, %v2086
        %v2088 = vlaneseq
        %v2089 = vshrl.u32 %v2088, 7
        %v2090 = vsub.s32 1, %v2089
        %v2091 = vrot.slane %v2082, %v2090
        %2094 = vrot.lane.b32.xlu0 %v2087, 56
        %v2095 = vpop.permute.xlu0 %2094
        %2096 = vrot.lane.b32.xlu0 %v2091, 56
        %v2097 = vpop.permute.xlu0 %2096
        %v2098 = vsel %vm370, %v2095, %v2097
        %v2099 = vsel %vm370, %v2097, %v2095
        %s2100 = scalar_lea.vmem [#allocation5], 400
        %v2101 = vld [vmem:[%s2100] ss:$8 sm:$0x3]
        %v2103 = vlaneseq
        %v2104 = vshrl.u32 %v2103, 7
        %v2105 = vsub.s32 0, %v2104
        %v2106 = vrot.slane %v2101, %v2105
        %v2107 = vlaneseq
        %v2108 = vshrl.u32 %v2107, 7
        %v2109 = vsub.s32 1, %v2108
        %v2110 = vrot.slane %v2101, %v2109
        %v2113 = vmul.f32 %v2098, %v2106
        %v2114 = vmul.f32 %v2099, %v2110
        %v2117 = vcombine.low %v2113, %v2114
        %v2119 = vunpack.c.l.s4 1966171168
        %v2120 = vunpack.c.0.s8 %v2119
        %v2121 = vlaneseq
        %v2122 = vshrl.u32 %v2121, 7
        %v2123 = vsub.s32 %v2120, %v2122
        %v2124 = vrot.slane %v2117, %v2123
        %v2126 = vunpack.c.l.s4 1966171168
        %v2127 = vunpack.c.0.s8 %v2126
        %v2128 = vlaneseq
        %v2129 = vshrl.u32 %v2128, 7
        %v2130 = vsub.s32 %v2127, %v2129
        %v2131 = vrot.slane %v2124, %v2130
        %v2133 = vadd.f32 %v2080, %v2131
        %s2134 = scalar_lea.vmem [#allocation3], 50
        %v2135 = vld [vmem:[%s2134] ss:$8 sm:$0x3]
        %v2137 = vlaneseq
        %v2138 = vshrl.u32 %v2137, 7
        %v2139 = vsub.s32 0, %v2138
        %v2140 = vrot.slane %v2135, %v2139
        %v2141 = vlaneseq
        %v2142 = vshrl.u32 %v2141, 7
        %v2143 = vsub.s32 1, %v2142
        %v2144 = vrot.slane %v2135, %v2143
        %2147 = vrot.lane.b32.xlu0 %v2140, 55
        %v2148 = vpop.permute.xlu0 %2147
        %2149 = vrot.lane.b32.xlu0 %v2144, 55
        %v2150 = vpop.permute.xlu0 %2149
        %v2151 = vsel %vm383, %v2148, %v2150
        %v2152 = vsel %vm383, %v2150, %v2148
        %s2153 = scalar_lea.vmem [#allocation5], 416
        %v2154 = vld [vmem:[%s2153] ss:$8 sm:$0x3]
        %v2156 = vlaneseq
        %v2157 = vshrl.u32 %v2156, 7
        %v2158 = vsub.s32 0, %v2157
        %v2159 = vrot.slane %v2154, %v2158
        %v2160 = vlaneseq
        %v2161 = vshrl.u32 %v2160, 7
        %v2162 = vsub.s32 1, %v2161
        %v2163 = vrot.slane %v2154, %v2162
        %v2166 = vmul.f32 %v2151, %v2159
        %v2167 = vmul.f32 %v2152, %v2163
        %v2170 = vcombine.low %v2166, %v2167
        %v2172 = vunpack.c.l.s4 1966171168
        %v2173 = vunpack.c.0.s8 %v2172
        %v2174 = vlaneseq
        %v2175 = vshrl.u32 %v2174, 7
        %v2176 = vsub.s32 %v2173, %v2175
        %v2177 = vrot.slane %v2170, %v2176
        %v2179 = vunpack.c.l.s4 1966171168
        %v2180 = vunpack.c.0.s8 %v2179
        %v2181 = vlaneseq
        %v2182 = vshrl.u32 %v2181, 7
        %v2183 = vsub.s32 %v2180, %v2182
        %v2184 = vrot.slane %v2177, %v2183
        %v2186 = vadd.f32 %v2133, %v2184
        %s2187 = sld [smem:[#allocation4]]
        %v2188 = vstv %s2187
        %v2189 = vadd.f32 %v2186, %v2188
        %v2190 = vxor.u32 %v2189, 2147483648
        %v2191 = vmul.f32 %v2190, 1.442695
        %v2192 = vpow.pop %v2191
        %v2193 = vadd.f32 %v2192, 1.0
        %v2194 = vrcp.pop %v2193
        %v2195 = vmul.f32 1.0, %v2194
        %v2196 = vld [vmem:[%s265] sm:$0xff]
        %v2198 = vlaneseq
        %v2199 = vshrl.u32 %v2198, 7
        %v2200 = vsub.s32 0, %v2199
        %v2201 = vrot.slane %v2195, %v2200
        %v2202 = vlaneseq
        %v2203 = vshrl.u32 %v2202, 7
        %v2204 = vsub.s32 1, %v2203
        %v2205 = vrot.slane %v2195, %v2204
        %v2209 = vcombine.high %v2196, %v2196
        %v2211 = vmul.f32 %v2201, %v2196
        %v2212 = vmul.f32 %v2205, %v2209
        %v2215 = vcombine.low %v2211, %v2212
        %2217 = vst [vmem:[%s260] sm:$0xff] %v2215
        %s2218 = sand.u32 %s161, 1
        %s2219 = scalar_lea.sflag [#allocation7], %s2218
        %s2220 = sand.u32 %s161, 1
        %s2221 = smul.addr %s2220, 8
        %s2222 = scalar_lea.vmem [#allocation8], %s2221
        // Predicated region
        $region49: #{tpu_custom_call.1} parent=43 // pred_check
          %p2223 = pneg %p171
        $region50: #{tpu_custom_call.1} parent=43 // pred_check_branch
          %2225 = sbr.rel (%p2223) target = $region52
        $region51: #{tpu_custom_call.1} parent=43 // pred_region
          %s2227 = ssub.s32 128, 128
          %2228 = vsyncadd %s2219, %s2227
          %s2229 = smul.addr %s22, 2
          %s2230 = smul.addr %s2229, 64
          %s2231 = scalar_lea.hbm %s6, %s2230
          %s2233 = sshll.u32 %s2222, 4
          %s2234 = int_to_ptr.vmem [resolvable:$true] %s2233
          %2236 = dma.vmem_to_hbm [thread:$0]  %s2234, 128, %s2231, %s2219
        $region52: #{tpu_custom_call.1} parent=43 // pred_fallthru
          _
      $region44: #{tpu_custom_call.1} parent=5 // pred_fallthru
        _
      %p2237 = scmp.le.s32.totalorder 2, %s17
      // Predicated region
      $region53: #{tpu_custom_call.1} parent=5 // pred_check
        %p2238 = pneg %p2237
      $region54: #{tpu_custom_call.1} parent=5 // pred_check_branch
        %2240 = sbr.rel (%p2238) target = $region56
      $region55: #{tpu_custom_call.1} parent=5 // pred_region
        %s2241 = ssub.s32 %s17, 2
        // Predicated region
        $region57: #{tpu_custom_call.1} parent=55 // pred_check
          %p2242 = pneg %p177
        $region58: #{tpu_custom_call.1} parent=55 // pred_check_branch
          %2244 = sbr.rel (%p2242) target = $region60
        $region59: #{tpu_custom_call.1} parent=55 // pred_region
          %s2245 = sand.u32 %s162, 1
          %s2246 = scalar_lea.sflag [#allocation7], %s2245
          %s2247 = sand.u32 %s162, 1
          %s2248 = smul.addr %s2247, 8
          %s2249 = scalar_lea.vmem [#allocation8], %s2248
          %2250 = dma.done %s2246, 128
        $region60: #{tpu_custom_call.1} parent=55 // pred_fallthru
          _
      $region56: #{tpu_custom_call.1} parent=5 // pred_fallthru
        _
    $region6: #{tpu_custom_call.1} parent=1 // loop_footer
      %s21 = sadd.s32 1, %s17
    $region7: #{tpu_custom_call.1} parent=1 // loop_footer_branch
      %16 = sbr.rel target = $region3
    $region8: #{tpu_custom_call.1} parent=1 // loop_exit
      _
    %2251 = vsyncpa [#allocation6], 1
    %s2252 = scalar_lea.sflag [#allocation6], 1
    %2253 = vsyncpa %s2252, 1
    %2254 = vsyncpa [#allocation7], 1
    %s2255 = scalar_lea.sflag [#allocation7], 1
    %2256 = vsyncpa %s2255, 1

</llo_original>
